<compile_context>
chip_gen: v7x
topology: tpu7x:2x2x1
jax: 0.10.0
libtpu: 0.0.40
codegen_flags: <defaults>
</compile_context>

<pallas_src>
import jax
import jax.numpy as jnp
from jax.experimental import pallas as pl
from jax.experimental.pallas import tpu as pltpu


def _round_up(x, m):
    return (x + m - 1) // m * m


def _pick_b_tile(n):
    """Largest divisor of n keeping the grid length >= 2 (feeds both v7x TCs)."""
    if n <= 1:
        return 1
    best = 1
    for d in range(1, n // 2 + 1):
        if n % d == 0:
            best = d
    return best


def _make_kernel(H, W, K, Czp, Hd, B):
    P = K // 2
    HW = H * W
    C4 = 4 * Hd
    EPS = 1e-5
    inv_n = 1.0 / (Hd * HW)
    bf16 = jnp.bfloat16

    def kernel(z_ref, c_ref, w_ref, aff_ref, mask_ref, wc_ref,
               h_out_ref, c_out_ref):
        # ---- im2col patch from K*K shifted lane-windows (x B samples) ------
        # Window start ky*W + kx of the zero-extended flat buffer reads input
        # pixel (y + ky - P, x + kx - P); rows out of [0, H) fall into the
        # zero extension, columns out of [0, W) are zeroed by the per-kx mask.
        # Taps are sliced straight from the ref and cast to bf16 before the
        # mask multiply (mask is exactly 0/1, so this is exact).
        taps = []
        for ky in range(K):
            for kx in range(K):
                q0 = ky * W + kx
                m = mask_ref[kx] if kx != P else None      # (1, HW) bf16
                pieces = []
                for b in range(B):
                    t = z_ref[b, :, q0:q0 + HW].astype(bf16)   # (Czp, HW)
                    if m is not None:
                        t = t * m
                    pieces.append(t)
                taps.append(pieces[0] if B == 1
                            else jnp.concatenate(pieces, axis=-1))
        patch = jnp.concatenate(taps, axis=0)          # (K*K*Czp, B*HW) bf16

        # ---- conv2d as ONE MXU matmul, f32 accumulation ---------------------
        # (On v5e the contraction depth 9*Czp may exceed 128 -> 2 MXU passes;
        #  negligible at this size, and irrelevant on v6e/v7x's 256-deep MXU.)
        acc = jnp.dot(w_ref[...], patch,
                      preferred_element_type=jnp.float32)   # (C4, B*HW) f32

        bias = aff_ref[0]                              # (C4, 1) f32
        gamma = aff_ref[1]                             # (C4, 1)
        beta = aff_ref[2]                              # (C4, 1)
        wci = wc_ref[0]                                # (Hd, HW) f32
        wcf = wc_ref[1]
        wco = wc_ref[2]

        for b in range(B):
            acc_b = acc[:, b * HW:(b + 1) * HW]        # (C4, HW), lane-aligned

            # --- GroupNorm(4, C4): 2 lane reductions + per-group combine ----
            # Stats of y = acc + bias are computed from the raw-acc row sums
            # (the bias is folded exactly into the scalars / the shift), so
            # no bias pass over acc is needed.
            rs = jnp.sum(acc_b, axis=-1, keepdims=True)            # (C4, 1)
            rss = jnp.sum(acc_b * acc_b, axis=-1, keepdims=True)   # (C4, 1)

            c_pre = c_ref[b]                           # (Hd, HW) f32
            gates = []
            for g in range(4):
                sl = slice(g * Hd, (g + 1) * Hd)
                b_g, rs_g, rss_g = bias[sl], rs[sl], rss[sl]
                y_sum = jnp.sum(rs_g) + HW * jnp.sum(b_g)
                y_sq = jnp.sum(rss_g + 2.0 * b_g * rs_g + HW * (b_g * b_g))
                mu = y_sum * inv_n
                var = y_sq * inv_n - mu * mu           # one-pass; values O(1)
                inv = jax.lax.rsqrt(var + EPS)
                s = inv * gamma[sl]                    # (Hd, 1)
                t = beta[sl] + (b_g - mu) * s          # (Hd, 1)
                gates.append(acc_b[sl, :] * s + t)     # fused scale/shift
            conv_i, conv_f, conv_g, conv_o = gates

            # --- peephole LSTM gates: (Hd, HW) lane-dense f32 VPU/EUP work --
            i = jax.nn.sigmoid(conv_i + wci * c_pre)
            f = jax.nn.sigmoid(conv_f + wcf * c_pre)
            c = f * c_pre + i * jnp.tanh(conv_g)
            o = jax.nn.sigmoid(conv_o + wco * c)
            h = o * jnp.tanh(c)

            h_out_ref[b] = h                           # unmasked 256-lane vst
            c_out_ref[b] = c

    return kernel


def conv_lstm_cell_pallas(x, h_pre, c_pre, params, *, kernel_size, b_tile=None):
    """x, h_pre, c_pre are NCHW (PyTorch convention). Returns (h, c) in NCHW."""
    N, Cin, H, W = x.shape
    Hd = h_pre.shape[1]
    K = kernel_size
    P = K // 2
    HW = H * W
    Cz = Cin + Hd
    Czp = _round_up(Cz, 8)          # channel pad to a sublane multiple
    C4 = 4 * Hd
    off = P * W + P                 # flat-index zero extension on each side
    Lext = HW + 2 * off
    f32 = jnp.float32

    B = _pick_b_tile(N) if b_tile is None else b_tile
    assert N % B == 0
    G = N // B

    # NCHW -> (N, C, H*W) is a free (contiguous) reshape; concat x with h_pre
    # and zero-extend the flat spatial axis for the im2col window trick.
    z = jnp.concatenate([x.reshape(N, Cin, HW).astype(f32),
                         h_pre.reshape(N, Hd, HW).astype(f32)], axis=1)
    z = jnp.pad(z, ((0, 0), (0, Czp - Cz), (off, off)))      # (N, Czp, Lext)
    c_flat = c_pre.reshape(N, Hd, HW).astype(f32)

    # conv weight (C4, Cz, K, K) -> (C4, K*K*Czp): tap-major, channel-minor,
    # zero-padded channels, bf16 for the MXU (f32 accumulation in-kernel).
    wt = jnp.transpose(params["conv_w"], (2, 3, 1, 0))       # (K, K, Cz, C4)
    wt = jnp.pad(wt, ((0, 0), (0, 0), (0, Czp - Cz), (0, 0)))
    w_stack = wt.reshape(K * K * Czp, C4).T.astype(jnp.bfloat16)

    # packed constants: bias/gamma/beta -> (3, C4, 1); Wci/Wcf/Wco -> (3, Hd, HW)
    aff = jnp.stack([params["conv_b"], params["gn_gamma"], params["gn_beta"]],
                    axis=0).reshape(3, C4, 1).astype(f32)
    wc = jnp.stack([params["Wci"], params["Wcf"], params["Wco"]],
                   axis=0).reshape(3, Hd, HW).astype(f32)

    # per-kx width-boundary mask (0/1, exact in bf16): zero where the read
    # column x + kx - P leaves [0, W).
    xs = jnp.arange(HW, dtype=jnp.int32) % W
    mask = jnp.stack(
        [((xs + (kx - P) >= 0) & (xs + (kx - P) < W)) for kx in range(K)],
        axis=0).astype(jnp.bfloat16).reshape(K, 1, HW)

    kernel = _make_kernel(H, W, K, Czp, Hd, B)

    h_out, c_out = pl.pallas_call(
        kernel,
        out_shape=(jax.ShapeDtypeStruct((N, Hd, HW), f32),
                   jax.ShapeDtypeStruct((N, Hd, HW), f32)),
        grid_spec=pltpu.PrefetchScalarGridSpec(
            num_scalar_prefetch=0,
            grid=(G,),
            in_specs=[
                pl.BlockSpec((B, Czp, Lext), lambda g: (g, 0, 0)),
                pl.BlockSpec((B, Hd, HW), lambda g: (g, 0, 0)),
                pl.BlockSpec((C4, K * K * Czp), lambda g: (0, 0)),
                pl.BlockSpec((3, C4, 1), lambda g: (0, 0, 0)),
                pl.BlockSpec((K, 1, HW), lambda g: (0, 0, 0)),
                pl.BlockSpec((3, Hd, HW), lambda g: (0, 0, 0)),
            ],
            out_specs=[
                pl.BlockSpec((B, Hd, HW), lambda g: (g, 0, 0)),
                pl.BlockSpec((B, Hd, HW), lambda g: (g, 0, 0)),
            ],
        ),
        compiler_params=pltpu.CompilerParams(
            dimension_semantics=("parallel",)),   # grid steps independent
    )(z, c_flat, w_stack, aff, mask, wc)

    # (N, Hd, H*W) -> NCHW is a free reshape (no transpose needed).
    return h_out.reshape(N, Hd, H, W), c_out.reshape(N, Hd, H, W)


def conv_lstm_cell_ref(x, h_pre, c_pre, params, *, kernel_size):
    """Pure-JAX f32 reference mirroring the PyTorch module (NCHW)."""
    z = jnp.concatenate([x, h_pre], axis=1)
    conv = jax.lax.conv_general_dilated(
        z, params["conv_w"],
        window_strides=(1, 1),
        padding=[(kernel_size // 2, kernel_size // 2)] * 2,
        dimension_numbers=("NCHW", "OIHW", "NCHW"))
    conv = conv + params["conv_b"][None, :, None, None]
    N, C, H, W = conv.shape
    g = conv.reshape(N, 4, C // 4, H, W)
    mean = jnp.mean(g, axis=(2, 3, 4), keepdims=True)
    var = jnp.mean((g - mean) ** 2, axis=(2, 3, 4), keepdims=True)
    g = (g - mean) * jax.lax.rsqrt(var + 1e-5)
    conv = g.reshape(N, C, H, W)
    conv = conv * params["gn_gamma"][None, :, None, None] \
                + params["gn_beta"][None, :, None, None]
    conv_i, conv_f, conv_g, conv_o = jnp.split(conv, 4, axis=1)
    i = jax.nn.sigmoid(conv_i + params["Wci"][None] * c_pre)
    f = jax.nn.sigmoid(conv_f + params["Wcf"][None] * c_pre)
    c = f * c_pre + i * jnp.tanh(conv_g)
    o = jax.nn.sigmoid(conv_o + params["Wco"][None] * c)
    h = o * jnp.tanh(c)
    return h, c


if __name__ == "__main__":
    # Small deterministic config: batch=2, input_dim=4, hidden_dim=8,
    # kernel_size=3, img_size=(16, 16).
    N, Cin, Hd, K, H, W = 2, 4, 8, 3, 16, 16
    Cz, C4 = Cin + Hd, 4 * Hd

    key = jax.random.PRNGKey(0)
    ks = jax.random.split(key, 10)

    params = {
        "conv_w": 0.1 * jax.random.normal(ks[0], (C4, Cz, K, K), jnp.float32),
        "conv_b": 0.1 * jax.random.normal(ks[1], (C4,), jnp.float32),
        "gn_gamma": 1.0 + 0.1 * jax.random.normal(ks[2], (C4,), jnp.float32),
        "gn_beta": 0.1 * jax.random.normal(ks[3], (C4,), jnp.float32),
        "Wci": 0.1 * jax.random.normal(ks[4], (Hd, H, W), jnp.float32),
        "Wcf": 0.1 * jax.random.normal(ks[5], (Hd, H, W), jnp.float32),
        "Wco": 0.1 * jax.random.normal(ks[6], (Hd, H, W), jnp.float32),
    }

    x = jax.random.normal(ks[7], (N, Cin, H, W), jnp.float32)
    h_pre = jax.random.normal(ks[8], (N, Hd, H, W), jnp.float32)
    c_pre = jax.random.normal(ks[9], (N, Hd, H, W), jnp.float32)

    h, c = conv_lstm_cell_pallas(x, h_pre, c_pre, params, kernel_size=K)
    jax.block_until_ready((h, c))

    h_ref, c_ref = conv_lstm_cell_ref(x, h_pre, c_pre, params, kernel_size=K)
    # Tolerance accounts for the bf16 MXU matmul (GroupNorm renormalizes the
    # conv output, so the remaining error is small); gate/state math is f32.
    assert jnp.allclose(h, h_ref, atol=2e-2, rtol=2e-2), "h mismatch"
    assert jnp.allclose(c, c_ref, atol=2e-2, rtol=2e-2), "c mismatch"

    print("KERNEL_OK")
</pallas_src>

<mosaic_0001>
module attributes {stable_mosaic.version = 11 : i64} {
  func.func @kernel(%arg0: i32, %arg1: memref<1x16x290xf32, #tpu.memory_space<vmem>>, %arg2: memref<1x8x256xf32, #tpu.memory_space<vmem>>, %arg3: memref<32x144xbf16, #tpu.memory_space<vmem>>, %arg4: memref<3x32x1xf32, #tpu.memory_space<vmem>>, %arg5: memref<3x1x256xbf16, #tpu.memory_space<vmem>>, %arg6: memref<3x8x256xf32, #tpu.memory_space<vmem>>, %arg7: memref<1x8x256xf32, #tpu.memory_space<vmem>>, %arg8: memref<1x8x256xf32, #tpu.memory_space<vmem>>) attributes {dimension_semantics = [#tpu.dimension_semantics<parallel>], iteration_bounds = array<i64: 2>, scalar_prefetch = 0 : i64, scratch_operands = 0 : i64, tpu.core_type = #tpu.core_type<tc>, window_params = [{transform_indices = @transform_0, window_bounds = array<i64: 1, 16, 290>}, {transform_indices = @transform_1, window_bounds = array<i64: 1, 8, 256>}, {pipeline_mode = #tpu.pipeline_mode<synchronous>, transform_indices = @transform_2, window_bounds = array<i64: 32, 144>}, {pipeline_mode = #tpu.pipeline_mode<synchronous>, transform_indices = @transform_3, window_bounds = array<i64: 3, 32, 1>}, {pipeline_mode = #tpu.pipeline_mode<synchronous>, transform_indices = @transform_4, window_bounds = array<i64: 3, 1, 256>}, {pipeline_mode = #tpu.pipeline_mode<synchronous>, transform_indices = @transform_5, window_bounds = array<i64: 3, 8, 256>}, {transform_indices = @transform_6, window_bounds = array<i64: 1, 8, 256>}, {transform_indices = @transform_7, window_bounds = array<i64: 1, 8, 256>}]} {
    %c0 = arith.constant 0 : index
    %c0_0 = arith.constant 0 : index
    %c0_1 = arith.constant 0 : index
    %0 = vector.load %arg5[%c0, %c0_0, %c0_1] : memref<3x1x256xbf16, #tpu.memory_space<vmem>>, vector<1x1x256xbf16>
    %1 = vector.shape_cast %0 : vector<1x1x256xbf16> to vector<1x256xbf16>
    %c0_2 = arith.constant 0 : index
    %c0_3 = arith.constant 0 : index
    %c0_4 = arith.constant 0 : index
    %2 = vector.load %arg1[%c0_2, %c0_3, %c0_4] : memref<1x16x290xf32, #tpu.memory_space<vmem>>, vector<1x16x256xf32>
    %3 = vector.shape_cast %2 : vector<1x16x256xf32> to vector<16x256xf32>
    %4 = arith.truncf %3 : vector<16x256xf32> to vector<16x256xbf16>
    %5 = vector.broadcast %1 : vector<1x256xbf16> to vector<16x256xbf16>
    %6 = arith.mulf %4, %5 : vector<16x256xbf16>
    %c0_5 = arith.constant 0 : index
    %c0_6 = arith.constant 0 : index
    %c1 = arith.constant 1 : index
    %7 = vector.load %arg1[%c0_5, %c0_6, %c1] : memref<1x16x290xf32, #tpu.memory_space<vmem>>, vector<1x16x256xf32>
    %8 = vector.shape_cast %7 : vector<1x16x256xf32> to vector<16x256xf32>
    %9 = arith.truncf %8 : vector<16x256xf32> to vector<16x256xbf16>
    %c2 = arith.constant 2 : index
    %c0_7 = arith.constant 0 : index
    %c0_8 = arith.constant 0 : index
    %10 = vector.load %arg5[%c2, %c0_7, %c0_8] : memref<3x1x256xbf16, #tpu.memory_space<vmem>>, vector<1x1x256xbf16>
    %11 = vector.shape_cast %10 : vector<1x1x256xbf16> to vector<1x256xbf16>
    %c0_9 = arith.constant 0 : index
    %c0_10 = arith.constant 0 : index
    %c2_11 = arith.constant 2 : index
    %12 = vector.load %arg1[%c0_9, %c0_10, %c2_11] : memref<1x16x290xf32, #tpu.memory_space<vmem>>, vector<1x16x256xf32>
    %13 = vector.shape_cast %12 : vector<1x16x256xf32> to vector<16x256xf32>
    %14 = arith.truncf %13 : vector<16x256xf32> to vector<16x256xbf16>
    %15 = vector.broadcast %11 : vector<1x256xbf16> to vector<16x256xbf16>
    %16 = arith.mulf %14, %15 : vector<16x256xbf16>
    %c0_12 = arith.constant 0 : index
    %c0_13 = arith.constant 0 : index
    %c0_14 = arith.constant 0 : index
    %17 = vector.load %arg5[%c0_12, %c0_13, %c0_14] : memref<3x1x256xbf16, #tpu.memory_space<vmem>>, vector<1x1x256xbf16>
    %18 = vector.shape_cast %17 : vector<1x1x256xbf16> to vector<1x256xbf16>
    %c0_15 = arith.constant 0 : index
    %c0_16 = arith.constant 0 : index
    %c16 = arith.constant 16 : index
    %19 = vector.load %arg1[%c0_15, %c0_16, %c16] : memref<1x16x290xf32, #tpu.memory_space<vmem>>, vector<1x16x256xf32>
    %20 = vector.shape_cast %19 : vector<1x16x256xf32> to vector<16x256xf32>
    %21 = arith.truncf %20 : vector<16x256xf32> to vector<16x256xbf16>
    %22 = vector.broadcast %18 : vector<1x256xbf16> to vector<16x256xbf16>
    %23 = arith.mulf %21, %22 : vector<16x256xbf16>
    %c0_17 = arith.constant 0 : index
    %c0_18 = arith.constant 0 : index
    %c17 = arith.constant 17 : index
    %24 = vector.load %arg1[%c0_17, %c0_18, %c17] : memref<1x16x290xf32, #tpu.memory_space<vmem>>, vector<1x16x256xf32>
    %25 = vector.shape_cast %24 : vector<1x16x256xf32> to vector<16x256xf32>
    %26 = arith.truncf %25 : vector<16x256xf32> to vector<16x256xbf16>
    %c2_19 = arith.constant 2 : index
    %c0_20 = arith.constant 0 : index
    %c0_21 = arith.constant 0 : index
    %27 = vector.load %arg5[%c2_19, %c0_20, %c0_21] : memref<3x1x256xbf16, #tpu.memory_space<vmem>>, vector<1x1x256xbf16>
    %28 = vector.shape_cast %27 : vector<1x1x256xbf16> to vector<1x256xbf16>
    %c0_22 = arith.constant 0 : index
    %c0_23 = arith.constant 0 : index
    %c18 = arith.constant 18 : index
    %29 = vector.load %arg1[%c0_22, %c0_23, %c18] : memref<1x16x290xf32, #tpu.memory_space<vmem>>, vector<1x16x256xf32>
    %30 = vector.shape_cast %29 : vector<1x16x256xf32> to vector<16x256xf32>
    %31 = arith.truncf %30 : vector<16x256xf32> to vector<16x256xbf16>
    %32 = vector.broadcast %28 : vector<1x256xbf16> to vector<16x256xbf16>
    %33 = arith.mulf %31, %32 : vector<16x256xbf16>
    %c0_24 = arith.constant 0 : index
    %c0_25 = arith.constant 0 : index
    %c0_26 = arith.constant 0 : index
    %34 = vector.load %arg5[%c0_24, %c0_25, %c0_26] : memref<3x1x256xbf16, #tpu.memory_space<vmem>>, vector<1x1x256xbf16>
    %35 = vector.shape_cast %34 : vector<1x1x256xbf16> to vector<1x256xbf16>
    %c0_27 = arith.constant 0 : index
    %c0_28 = arith.constant 0 : index
    %c32 = arith.constant 32 : index
    %36 = vector.load %arg1[%c0_27, %c0_28, %c32] : memref<1x16x290xf32, #tpu.memory_space<vmem>>, vector<1x16x256xf32>
    %37 = vector.shape_cast %36 : vector<1x16x256xf32> to vector<16x256xf32>
    %38 = arith.truncf %37 : vector<16x256xf32> to vector<16x256xbf16>
    %39 = vector.broadcast %35 : vector<1x256xbf16> to vector<16x256xbf16>
    %40 = arith.mulf %38, %39 : vector<16x256xbf16>
    %c0_29 = arith.constant 0 : index
    %c0_30 = arith.constant 0 : index
    %c33 = arith.constant 33 : index
    %41 = vector.load %arg1[%c0_29, %c0_30, %c33] : memref<1x16x290xf32, #tpu.memory_space<vmem>>, vector<1x16x256xf32>
    %42 = vector.shape_cast %41 : vector<1x16x256xf32> to vector<16x256xf32>
    %43 = arith.truncf %42 : vector<16x256xf32> to vector<16x256xbf16>
    %c2_31 = arith.constant 2 : index
    %c0_32 = arith.constant 0 : index
    %c0_33 = arith.constant 0 : index
    %44 = vector.load %arg5[%c2_31, %c0_32, %c0_33] : memref<3x1x256xbf16, #tpu.memory_space<vmem>>, vector<1x1x256xbf16>
    %45 = vector.shape_cast %44 : vector<1x1x256xbf16> to vector<1x256xbf16>
    %c0_34 = arith.constant 0 : index
    %c0_35 = arith.constant 0 : index
    %c34 = arith.constant 34 : index
    %46 = vector.load %arg1[%c0_34, %c0_35, %c34] : memref<1x16x290xf32, #tpu.memory_space<vmem>>, vector<1x16x256xf32>
    %47 = vector.shape_cast %46 : vector<1x16x256xf32> to vector<16x256xf32>
    %48 = arith.truncf %47 : vector<16x256xf32> to vector<16x256xbf16>
    %49 = vector.broadcast %45 : vector<1x256xbf16> to vector<16x256xbf16>
    %50 = arith.mulf %48, %49 : vector<16x256xbf16>
    %51 = tpu.concatenate %6, %9, %16, %23, %26, %33, %40, %43, %50 in 0 : vector<16x256xbf16>, vector<16x256xbf16>, vector<16x256xbf16>, vector<16x256xbf16>, vector<16x256xbf16>, vector<16x256xbf16>, vector<16x256xbf16>, vector<16x256xbf16>, vector<16x256xbf16> -> vector<144x256xbf16>
    %c0_36 = arith.constant 0 : index
    %c0_37 = arith.constant 0 : index
    %52 = vector.load %arg3[%c0_36, %c0_37] : memref<32x144xbf16, #tpu.memory_space<vmem>>, vector<32x144xbf16>
    %cst = arith.constant dense<0.000000e+00> : vector<32x256xf32>
    %53 = tpu.matmul %52, %51, %cst {dimension_numbers = #tpu.dot_dimension_numbers<[1], [0], [0], [1], [0, 0, 1, 1], [], []>} : vector<32x144xbf16>, vector<144x256xbf16>, vector<32x256xf32> -> vector<32x256xf32>
    %c0_38 = arith.constant 0 : index
    %c0_39 = arith.constant 0 : index
    %c0_40 = arith.constant 0 : index
    %54 = vector.load %arg4[%c0_38, %c0_39, %c0_40] : memref<3x32x1xf32, #tpu.memory_space<vmem>>, vector<1x32x1xf32>
    %55 = vector.shape_cast %54 : vector<1x32x1xf32> to vector<32x1xf32>
    %c1_41 = arith.constant 1 : index
    %c0_42 = arith.constant 0 : index
    %c0_43 = arith.constant 0 : index
    %56 = vector.load %arg4[%c1_41, %c0_42, %c0_43] : memref<3x32x1xf32, #tpu.memory_space<vmem>>, vector<1x32x1xf32>
    %57 = vector.shape_cast %56 : vector<1x32x1xf32> to vector<32x1xf32>
    %c2_44 = arith.constant 2 : index
    %c0_45 = arith.constant 0 : index
    %c0_46 = arith.constant 0 : index
    %58 = vector.load %arg4[%c2_44, %c0_45, %c0_46] : memref<3x32x1xf32, #tpu.memory_space<vmem>>, vector<1x32x1xf32>
    %59 = vector.shape_cast %58 : vector<1x32x1xf32> to vector<32x1xf32>
    %c0_47 = arith.constant 0 : index
    %c0_48 = arith.constant 0 : index
    %c0_49 = arith.constant 0 : index
    %60 = vector.load %arg6[%c0_47, %c0_48, %c0_49] : memref<3x8x256xf32, #tpu.memory_space<vmem>>, vector<1x8x256xf32>
    %61 = vector.shape_cast %60 : vector<1x8x256xf32> to vector<8x256xf32>
    %c1_50 = arith.constant 1 : index
    %c0_51 = arith.constant 0 : index
    %c0_52 = arith.constant 0 : index
    %62 = vector.load %arg6[%c1_50, %c0_51, %c0_52] : memref<3x8x256xf32, #tpu.memory_space<vmem>>, vector<1x8x256xf32>
    %63 = vector.shape_cast %62 : vector<1x8x256xf32> to vector<8x256xf32>
    %c2_53 = arith.constant 2 : index
    %c0_54 = arith.constant 0 : index
    %c0_55 = arith.constant 0 : index
    %64 = vector.load %arg6[%c2_53, %c0_54, %c0_55] : memref<3x8x256xf32, #tpu.memory_space<vmem>>, vector<1x8x256xf32>
    %65 = vector.shape_cast %64 : vector<1x8x256xf32> to vector<8x256xf32>
    %cst_56 = arith.constant dense<0.000000e+00> : vector<32xf32>
    %66 = vector.multi_reduction <add>, %53, %cst_56 [1] : vector<32x256xf32> to vector<32xf32>
    %67 = vector.shape_cast %66 : vector<32xf32> to vector<32x1xf32>
    %68 = arith.mulf %53, %53 : vector<32x256xf32>
    %cst_57 = arith.constant dense<0.000000e+00> : vector<32xf32>
    %69 = vector.multi_reduction <add>, %68, %cst_57 [1] : vector<32x256xf32> to vector<32xf32>
    %70 = vector.shape_cast %69 : vector<32xf32> to vector<32x1xf32>
    %c0_58 = arith.constant 0 : index
    %c0_59 = arith.constant 0 : index
    %c0_60 = arith.constant 0 : index
    %71 = vector.load %arg2[%c0_58, %c0_59, %c0_60] : memref<1x8x256xf32, #tpu.memory_space<vmem>>, vector<1x8x256xf32>
    %72 = vector.shape_cast %71 : vector<1x8x256xf32> to vector<8x256xf32>
    %73 = vector.extract_strided_slice %55 {offsets = [0, 0], sizes = [8, 1], strides = [1, 1]} : vector<32x1xf32> to vector<8x1xf32>
    %74 = vector.extract_strided_slice %67 {offsets = [0, 0], sizes = [8, 1], strides = [1, 1]} : vector<32x1xf32> to vector<8x1xf32>
    %75 = vector.extract_strided_slice %70 {offsets = [0, 0], sizes = [8, 1], strides = [1, 1]} : vector<32x1xf32> to vector<8x1xf32>
    %76 = vector.shape_cast %74 : vector<8x1xf32> to vector<1x8x1xf32>
    %cst_61 = arith.constant dense<0.000000e+00> : vector<1xf32>
    %77 = vector.multi_reduction <add>, %76, %cst_61 [1, 2] : vector<1x8x1xf32> to vector<1xf32>
    %78 = vector.shape_cast %77 : vector<1xf32> to vector<1x1x1xf32>
    %79 = vector.extract %78[0, 0, 0] : f32 from vector<1x1x1xf32>
    %80 = vector.shape_cast %73 : vector<8x1xf32> to vector<1x8x1xf32>
    %cst_62 = arith.constant dense<0.000000e+00> : vector<1xf32>
    %81 = vector.multi_reduction <add>, %80, %cst_62 [1, 2] : vector<1x8x1xf32> to vector<1xf32>
    %82 = vector.shape_cast %81 : vector<1xf32> to vector<1x1x1xf32>
    %83 = vector.extract %82[0, 0, 0] : f32 from vector<1x1x1xf32>
    %cst_63 = arith.constant 2.560000e+02 : f32
    %84 = arith.mulf %cst_63, %83 : f32
    %85 = arith.addf %79, %84 : f32
    %cst_64 = arith.constant 2.000000e+00 : f32
    %86 = vector.broadcast %cst_64 : f32 to vector<8x1xf32>
    %87 = arith.mulf %86, %73 : vector<8x1xf32>
    %88 = arith.mulf %87, %74 : vector<8x1xf32>
    %89 = arith.addf %75, %88 : vector<8x1xf32>
    %90 = arith.mulf %73, %73 : vector<8x1xf32>
    %cst_65 = arith.constant 2.560000e+02 : f32
    %91 = vector.broadcast %cst_65 : f32 to vector<8x1xf32>
    %92 = arith.mulf %91, %90 : vector<8x1xf32>
    %93 = arith.addf %89, %92 : vector<8x1xf32>
    %94 = vector.shape_cast %93 : vector<8x1xf32> to vector<1x8x1xf32>
    %cst_66 = arith.constant dense<0.000000e+00> : vector<1xf32>
    %95 = vector.multi_reduction <add>, %94, %cst_66 [1, 2] : vector<1x8x1xf32> to vector<1xf32>
    %96 = vector.shape_cast %95 : vector<1xf32> to vector<1x1x1xf32>
    %97 = vector.extract %96[0, 0, 0] : f32 from vector<1x1x1xf32>
    %cst_67 = arith.constant 4.8828125E-4 : f32
    %98 = arith.mulf %85, %cst_67 : f32
    %cst_68 = arith.constant 4.8828125E-4 : f32
    %99 = arith.mulf %97, %cst_68 : f32
    %100 = arith.mulf %98, %98 : f32
    %101 = arith.subf %99, %100 : f32
    %cst_69 = arith.constant 9.99999974E-6 : f32
    %102 = arith.addf %101, %cst_69 : f32
    %103 = math.rsqrt %102 : f32
    %104 = vector.extract_strided_slice %57 {offsets = [0, 0], sizes = [8, 1], strides = [1, 1]} : vector<32x1xf32> to vector<8x1xf32>
    %105 = vector.broadcast %103 : f32 to vector<8x1xf32>
    %106 = arith.mulf %105, %104 : vector<8x1xf32>
    %107 = vector.extract_strided_slice %59 {offsets = [0, 0], sizes = [8, 1], strides = [1, 1]} : vector<32x1xf32> to vector<8x1xf32>
    %108 = vector.broadcast %98 : f32 to vector<8x1xf32>
    %109 = arith.subf %73, %108 : vector<8x1xf32>
    %110 = arith.mulf %109, %106 : vector<8x1xf32>
    %111 = arith.addf %107, %110 : vector<8x1xf32>
    %112 = vector.extract_strided_slice %53 {offsets = [0, 0], sizes = [8, 256], strides = [1, 1]} : vector<32x256xf32> to vector<8x256xf32>
    %113 = vector.broadcast %106 : vector<8x1xf32> to vector<8x256xf32>
    %114 = arith.mulf %112, %113 : vector<8x256xf32>
    %115 = vector.broadcast %111 : vector<8x1xf32> to vector<8x256xf32>
    %116 = arith.addf %114, %115 : vector<8x256xf32>
    %117 = vector.extract_strided_slice %55 {offsets = [8, 0], sizes = [8, 1], strides = [1, 1]} : vector<32x1xf32> to vector<8x1xf32>
    %118 = vector.extract_strided_slice %67 {offsets = [8, 0], sizes = [8, 1], strides = [1, 1]} : vector<32x1xf32> to vector<8x1xf32>
    %119 = vector.extract_strided_slice %70 {offsets = [8, 0], sizes = [8, 1], strides = [1, 1]} : vector<32x1xf32> to vector<8x1xf32>
    %120 = vector.shape_cast %118 : vector<8x1xf32> to vector<1x8x1xf32>
    %cst_70 = arith.constant dense<0.000000e+00> : vector<1xf32>
    %121 = vector.multi_reduction <add>, %120, %cst_70 [1, 2] : vector<1x8x1xf32> to vector<1xf32>
    %122 = vector.shape_cast %121 : vector<1xf32> to vector<1x1x1xf32>
    %123 = vector.extract %122[0, 0, 0] : f32 from vector<1x1x1xf32>
    %124 = vector.shape_cast %117 : vector<8x1xf32> to vector<1x8x1xf32>
    %cst_71 = arith.constant dense<0.000000e+00> : vector<1xf32>
    %125 = vector.multi_reduction <add>, %124, %cst_71 [1, 2] : vector<1x8x1xf32> to vector<1xf32>
    %126 = vector.shape_cast %125 : vector<1xf32> to vector<1x1x1xf32>
    %127 = vector.extract %126[0, 0, 0] : f32 from vector<1x1x1xf32>
    %cst_72 = arith.constant 2.560000e+02 : f32
    %128 = arith.mulf %cst_72, %127 : f32
    %129 = arith.addf %123, %128 : f32
    %cst_73 = arith.constant 2.000000e+00 : f32
    %130 = vector.broadcast %cst_73 : f32 to vector<8x1xf32>
    %131 = arith.mulf %130, %117 : vector<8x1xf32>
    %132 = arith.mulf %131, %118 : vector<8x1xf32>
    %133 = arith.addf %119, %132 : vector<8x1xf32>
    %134 = arith.mulf %117, %117 : vector<8x1xf32>
    %cst_74 = arith.constant 2.560000e+02 : f32
    %135 = vector.broadcast %cst_74 : f32 to vector<8x1xf32>
    %136 = arith.mulf %135, %134 : vector<8x1xf32>
    %137 = arith.addf %133, %136 : vector<8x1xf32>
    %138 = vector.shape_cast %137 : vector<8x1xf32> to vector<1x8x1xf32>
    %cst_75 = arith.constant dense<0.000000e+00> : vector<1xf32>
    %139 = vector.multi_reduction <add>, %138, %cst_75 [1, 2] : vector<1x8x1xf32> to vector<1xf32>
    %140 = vector.shape_cast %139 : vector<1xf32> to vector<1x1x1xf32>
    %141 = vector.extract %140[0, 0, 0] : f32 from vector<1x1x1xf32>
    %cst_76 = arith.constant 4.8828125E-4 : f32
    %142 = arith.mulf %129, %cst_76 : f32
    %cst_77 = arith.constant 4.8828125E-4 : f32
    %143 = arith.mulf %141, %cst_77 : f32
    %144 = arith.mulf %142, %142 : f32
    %145 = arith.subf %143, %144 : f32
    %cst_78 = arith.constant 9.99999974E-6 : f32
    %146 = arith.addf %145, %cst_78 : f32
    %147 = math.rsqrt %146 : f32
    %148 = vector.extract_strided_slice %57 {offsets = [8, 0], sizes = [8, 1], strides = [1, 1]} : vector<32x1xf32> to vector<8x1xf32>
    %149 = vector.broadcast %147 : f32 to vector<8x1xf32>
    %150 = arith.mulf %149, %148 : vector<8x1xf32>
    %151 = vector.extract_strided_slice %59 {offsets = [8, 0], sizes = [8, 1], strides = [1, 1]} : vector<32x1xf32> to vector<8x1xf32>
    %152 = vector.broadcast %142 : f32 to vector<8x1xf32>
    %153 = arith.subf %117, %152 : vector<8x1xf32>
    %154 = arith.mulf %153, %150 : vector<8x1xf32>
    %155 = arith.addf %151, %154 : vector<8x1xf32>
    %156 = vector.extract_strided_slice %53 {offsets = [8, 0], sizes = [8, 256], strides = [1, 1]} : vector<32x256xf32> to vector<8x256xf32>
    %157 = vector.broadcast %150 : vector<8x1xf32> to vector<8x256xf32>
    %158 = arith.mulf %156, %157 : vector<8x256xf32>
    %159 = vector.broadcast %155 : vector<8x1xf32> to vector<8x256xf32>
    %160 = arith.addf %158, %159 : vector<8x256xf32>
    %161 = vector.extract_strided_slice %55 {offsets = [16, 0], sizes = [8, 1], strides = [1, 1]} : vector<32x1xf32> to vector<8x1xf32>
    %162 = vector.extract_strided_slice %67 {offsets = [16, 0], sizes = [8, 1], strides = [1, 1]} : vector<32x1xf32> to vector<8x1xf32>
    %163 = vector.extract_strided_slice %70 {offsets = [16, 0], sizes = [8, 1], strides = [1, 1]} : vector<32x1xf32> to vector<8x1xf32>
    %164 = vector.shape_cast %162 : vector<8x1xf32> to vector<1x8x1xf32>
    %cst_79 = arith.constant dense<0.000000e+00> : vector<1xf32>
    %165 = vector.multi_reduction <add>, %164, %cst_79 [1, 2] : vector<1x8x1xf32> to vector<1xf32>
    %166 = vector.shape_cast %165 : vector<1xf32> to vector<1x1x1xf32>
    %167 = vector.extract %166[0, 0, 0] : f32 from vector<1x1x1xf32>
    %168 = vector.shape_cast %161 : vector<8x1xf32> to vector<1x8x1xf32>
    %cst_80 = arith.constant dense<0.000000e+00> : vector<1xf32>
    %169 = vector.multi_reduction <add>, %168, %cst_80 [1, 2] : vector<1x8x1xf32> to vector<1xf32>
    %170 = vector.shape_cast %169 : vector<1xf32> to vector<1x1x1xf32>
    %171 = vector.extract %170[0, 0, 0] : f32 from vector<1x1x1xf32>
    %cst_81 = arith.constant 2.560000e+02 : f32
    %172 = arith.mulf %cst_81, %171 : f32
    %173 = arith.addf %167, %172 : f32
    %cst_82 = arith.constant 2.000000e+00 : f32
    %174 = vector.broadcast %cst_82 : f32 to vector<8x1xf32>
    %175 = arith.mulf %174, %161 : vector<8x1xf32>
    %176 = arith.mulf %175, %162 : vector<8x1xf32>
    %177 = arith.addf %163, %176 : vector<8x1xf32>
    %178 = arith.mulf %161, %161 : vector<8x1xf32>
    %cst_83 = arith.constant 2.560000e+02 : f32
    %179 = vector.broadcast %cst_83 : f32 to vector<8x1xf32>
    %180 = arith.mulf %179, %178 : vector<8x1xf32>
    %181 = arith.addf %177, %180 : vector<8x1xf32>
    %182 = vector.shape_cast %181 : vector<8x1xf32> to vector<1x8x1xf32>
    %cst_84 = arith.constant dense<0.000000e+00> : vector<1xf32>
    %183 = vector.multi_reduction <add>, %182, %cst_84 [1, 2] : vector<1x8x1xf32> to vector<1xf32>
    %184 = vector.shape_cast %183 : vector<1xf32> to vector<1x1x1xf32>
    %185 = vector.extract %184[0, 0, 0] : f32 from vector<1x1x1xf32>
    %cst_85 = arith.constant 4.8828125E-4 : f32
    %186 = arith.mulf %173, %cst_85 : f32
    %cst_86 = arith.constant 4.8828125E-4 : f32
    %187 = arith.mulf %185, %cst_86 : f32
    %188 = arith.mulf %186, %186 : f32
    %189 = arith.subf %187, %188 : f32
    %cst_87 = arith.constant 9.99999974E-6 : f32
    %190 = arith.addf %189, %cst_87 : f32
    %191 = math.rsqrt %190 : f32
    %192 = vector.extract_strided_slice %57 {offsets = [16, 0], sizes = [8, 1], strides = [1, 1]} : vector<32x1xf32> to vector<8x1xf32>
    %193 = vector.broadcast %191 : f32 to vector<8x1xf32>
    %194 = arith.mulf %193, %192 : vector<8x1xf32>
    %195 = vector.extract_strided_slice %59 {offsets = [16, 0], sizes = [8, 1], strides = [1, 1]} : vector<32x1xf32> to vector<8x1xf32>
    %196 = vector.broadcast %186 : f32 to vector<8x1xf32>
    %197 = arith.subf %161, %196 : vector<8x1xf32>
    %198 = arith.mulf %197, %194 : vector<8x1xf32>
    %199 = arith.addf %195, %198 : vector<8x1xf32>
    %200 = vector.extract_strided_slice %53 {offsets = [16, 0], sizes = [8, 256], strides = [1, 1]} : vector<32x256xf32> to vector<8x256xf32>
    %201 = vector.broadcast %194 : vector<8x1xf32> to vector<8x256xf32>
    %202 = arith.mulf %200, %201 : vector<8x256xf32>
    %203 = vector.broadcast %199 : vector<8x1xf32> to vector<8x256xf32>
    %204 = arith.addf %202, %203 : vector<8x256xf32>
    %205 = vector.extract_strided_slice %55 {offsets = [24, 0], sizes = [8, 1], strides = [1, 1]} : vector<32x1xf32> to vector<8x1xf32>
    %206 = vector.extract_strided_slice %67 {offsets = [24, 0], sizes = [8, 1], strides = [1, 1]} : vector<32x1xf32> to vector<8x1xf32>
    %207 = vector.extract_strided_slice %70 {offsets = [24, 0], sizes = [8, 1], strides = [1, 1]} : vector<32x1xf32> to vector<8x1xf32>
    %208 = vector.shape_cast %206 : vector<8x1xf32> to vector<1x8x1xf32>
    %cst_88 = arith.constant dense<0.000000e+00> : vector<1xf32>
    %209 = vector.multi_reduction <add>, %208, %cst_88 [1, 2] : vector<1x8x1xf32> to vector<1xf32>
    %210 = vector.shape_cast %209 : vector<1xf32> to vector<1x1x1xf32>
    %211 = vector.extract %210[0, 0, 0] : f32 from vector<1x1x1xf32>
    %212 = vector.shape_cast %205 : vector<8x1xf32> to vector<1x8x1xf32>
    %cst_89 = arith.constant dense<0.000000e+00> : vector<1xf32>
    %213 = vector.multi_reduction <add>, %212, %cst_89 [1, 2] : vector<1x8x1xf32> to vector<1xf32>
    %214 = vector.shape_cast %213 : vector<1xf32> to vector<1x1x1xf32>
    %215 = vector.extract %214[0, 0, 0] : f32 from vector<1x1x1xf32>
    %cst_90 = arith.constant 2.560000e+02 : f32
    %216 = arith.mulf %cst_90, %215 : f32
    %217 = arith.addf %211, %216 : f32
    %cst_91 = arith.constant 2.000000e+00 : f32
    %218 = vector.broadcast %cst_91 : f32 to vector<8x1xf32>
    %219 = arith.mulf %218, %205 : vector<8x1xf32>
    %220 = arith.mulf %219, %206 : vector<8x1xf32>
    %221 = arith.addf %207, %220 : vector<8x1xf32>
    %222 = arith.mulf %205, %205 : vector<8x1xf32>
    %cst_92 = arith.constant 2.560000e+02 : f32
    %223 = vector.broadcast %cst_92 : f32 to vector<8x1xf32>
    %224 = arith.mulf %223, %222 : vector<8x1xf32>
    %225 = arith.addf %221, %224 : vector<8x1xf32>
    %226 = vector.shape_cast %225 : vector<8x1xf32> to vector<1x8x1xf32>
    %cst_93 = arith.constant dense<0.000000e+00> : vector<1xf32>
    %227 = vector.multi_reduction <add>, %226, %cst_93 [1, 2] : vector<1x8x1xf32> to vector<1xf32>
    %228 = vector.shape_cast %227 : vector<1xf32> to vector<1x1x1xf32>
    %229 = vector.extract %228[0, 0, 0] : f32 from vector<1x1x1xf32>
    %cst_94 = arith.constant 4.8828125E-4 : f32
    %230 = arith.mulf %217, %cst_94 : f32
    %cst_95 = arith.constant 4.8828125E-4 : f32
    %231 = arith.mulf %229, %cst_95 : f32
    %232 = arith.mulf %230, %230 : f32
    %233 = arith.subf %231, %232 : f32
    %cst_96 = arith.constant 9.99999974E-6 : f32
    %234 = arith.addf %233, %cst_96 : f32
    %235 = math.rsqrt %234 : f32
    %236 = vector.extract_strided_slice %57 {offsets = [24, 0], sizes = [8, 1], strides = [1, 1]} : vector<32x1xf32> to vector<8x1xf32>
    %237 = vector.broadcast %235 : f32 to vector<8x1xf32>
    %238 = arith.mulf %237, %236 : vector<8x1xf32>
    %239 = vector.extract_strided_slice %59 {offsets = [24, 0], sizes = [8, 1], strides = [1, 1]} : vector<32x1xf32> to vector<8x1xf32>
    %240 = vector.broadcast %230 : f32 to vector<8x1xf32>
    %241 = arith.subf %205, %240 : vector<8x1xf32>
    %242 = arith.mulf %241, %238 : vector<8x1xf32>
    %243 = arith.addf %239, %242 : vector<8x1xf32>
    %244 = vector.extract_strided_slice %53 {offsets = [24, 0], sizes = [8, 256], strides = [1, 1]} : vector<32x256xf32> to vector<8x256xf32>
    %245 = vector.broadcast %238 : vector<8x1xf32> to vector<8x256xf32>
    %246 = arith.mulf %244, %245 : vector<8x256xf32>
    %247 = vector.broadcast %243 : vector<8x1xf32> to vector<8x256xf32>
    %248 = arith.addf %246, %247 : vector<8x256xf32>
    %249 = arith.mulf %61, %72 : vector<8x256xf32>
    %250 = arith.addf %116, %249 : vector<8x256xf32>
    %251 = arith.negf %250 : vector<8x256xf32>
    %252 = math.exp %251 : vector<8x256xf32>
    %cst_97 = arith.constant 1.000000e+00 : f32
    %253 = vector.broadcast %cst_97 : f32 to vector<8x256xf32>
    %254 = arith.addf %253, %252 : vector<8x256xf32>
    %255 = arith.divf %253, %254 : vector<8x256xf32>
    %256 = arith.mulf %63, %72 : vector<8x256xf32>
    %257 = arith.addf %160, %256 : vector<8x256xf32>
    %258 = arith.negf %257 : vector<8x256xf32>
    %259 = math.exp %258 : vector<8x256xf32>
    %cst_98 = arith.constant 1.000000e+00 : f32
    %260 = vector.broadcast %cst_98 : f32 to vector<8x256xf32>
    %261 = arith.addf %260, %259 : vector<8x256xf32>
    %262 = arith.divf %260, %261 : vector<8x256xf32>
    %263 = arith.mulf %262, %72 : vector<8x256xf32>
    %264 = math.tanh %204 : vector<8x256xf32>
    %265 = arith.mulf %255, %264 : vector<8x256xf32>
    %266 = arith.addf %263, %265 : vector<8x256xf32>
    %267 = arith.mulf %65, %266 : vector<8x256xf32>
    %268 = arith.addf %248, %267 : vector<8x256xf32>
    %269 = arith.negf %268 : vector<8x256xf32>
    %270 = math.exp %269 : vector<8x256xf32>
    %cst_99 = arith.constant 1.000000e+00 : f32
    %271 = vector.broadcast %cst_99 : f32 to vector<8x256xf32>
    %272 = arith.addf %271, %270 : vector<8x256xf32>
    %273 = arith.divf %271, %272 : vector<8x256xf32>
    %274 = math.tanh %266 : vector<8x256xf32>
    %275 = arith.mulf %273, %274 : vector<8x256xf32>
    %c0_100 = arith.constant 0 : index
    %c0_101 = arith.constant 0 : index
    %c0_102 = arith.constant 0 : index
    %276 = vector.load %arg7[%c0_100, %c0_101, %c0_102] : memref<1x8x256xf32, #tpu.memory_space<vmem>>, vector<1x8x256xf32>
    %277 = vector.shape_cast %276 : vector<1x8x256xf32> to vector<8x256xf32>
    %278 = vector.shape_cast %275 : vector<8x256xf32> to vector<1x8x256xf32>
    tpu.vector_store %arg7[%c0_100, %c0_101, %c0_102], %278 {strides = array<i32>} : memref<1x8x256xf32, #tpu.memory_space<vmem>>, vector<1x8x256xf32>,
    %c0_103 = arith.constant 0 : index
    %c0_104 = arith.constant 0 : index
    %c0_105 = arith.constant 0 : index
    %279 = vector.load %arg8[%c0_103, %c0_104, %c0_105] : memref<1x8x256xf32, #tpu.memory_space<vmem>>, vector<1x8x256xf32>
    %280 = vector.shape_cast %279 : vector<1x8x256xf32> to vector<8x256xf32>
    %281 = vector.shape_cast %266 : vector<8x256xf32> to vector<1x8x256xf32>
    tpu.vector_store %arg8[%c0_103, %c0_104, %c0_105], %281 {strides = array<i32>} : memref<1x8x256xf32, #tpu.memory_space<vmem>>, vector<1x8x256xf32>,
    return
  }
  func.func @transform_0(%arg0: i32) -> (i32, i32, i32) {
    %c0_i32 = arith.constant 0 : i32
    %c0_i32_0 = arith.constant 0 : i32
    %c0_i32_1 = arith.constant 0 : i32
    return %arg0, %c0_i32, %c0_i32_0 : i32, i32, i32
  }
  func.func @transform_1(%arg0: i32) -> (i32, i32, i32) {
    %c0_i32 = arith.constant 0 : i32
    %c0_i32_0 = arith.constant 0 : i32
    %c0_i32_1 = arith.constant 0 : i32
    return %arg0, %c0_i32, %c0_i32_0 : i32, i32, i32
  }
  func.func @transform_2(%arg0: i32) -> (i32, i32) {
    %c0_i32 = arith.constant 0 : i32
    %c0_i32_0 = arith.constant 0 : i32
    %c0_i32_1 = arith.constant 0 : i32
    return %c0_i32, %c0_i32_0 : i32, i32
  }
  func.func @transform_3(%arg0: i32) -> (i32, i32, i32) {
    %c0_i32 = arith.constant 0 : i32
    %c0_i32_0 = arith.constant 0 : i32
    %c0_i32_1 = arith.constant 0 : i32
    %c0_i32_2 = arith.constant 0 : i32
    return %c0_i32, %c0_i32_0, %c0_i32_1 : i32, i32, i32
  }
  func.func @transform_4(%arg0: i32) -> (i32, i32, i32) {
    %c0_i32 = arith.constant 0 : i32
    %c0_i32_0 = arith.constant 0 : i32
    %c0_i32_1 = arith.constant 0 : i32
    %c0_i32_2 = arith.constant 0 : i32
    return %c0_i32, %c0_i32_0, %c0_i32_1 : i32, i32, i32
  }
  func.func @transform_5(%arg0: i32) -> (i32, i32, i32) {
    %c0_i32 = arith.constant 0 : i32
    %c0_i32_0 = arith.constant 0 : i32
    %c0_i32_1 = arith.constant 0 : i32
    %c0_i32_2 = arith.constant 0 : i32
    return %c0_i32, %c0_i32_0, %c0_i32_1 : i32, i32, i32
  }
  func.func @transform_6(%arg0: i32) -> (i32, i32, i32) {
    %c0_i32 = arith.constant 0 : i32
    %c0_i32_0 = arith.constant 0 : i32
    %c0_i32_1 = arith.constant 0 : i32
    return %arg0, %c0_i32, %c0_i32_0 : i32, i32, i32
  }
  func.func @transform_7(%arg0: i32) -> (i32, i32, i32) {
    %c0_i32 = arith.constant 0 : i32
    %c0_i32_0 = arith.constant 0 : i32
    %c0_i32_1 = arith.constant 0 : i32
    return %arg0, %c0_i32, %c0_i32_0 : i32, i32, i32
  }
}

</mosaic_0001>

<llo_original>
// kernel: tpu_custom_call.1
$region0: #{tpu_custom_call.1}
  #allocation0 [shape = 'u32[]', space=smem, size = 0x4, offset = 0x4, fixed_abs, tag = 'smem constant byte address 0x4 - core index']
  #allocation1 [shape = 'u32[144,128]{1,0:T(1,128)}', space=vmem, size = 0x12000, scoped, tag = 'internal scratch']
  %s0 = inlined_call_operand.vmem [shape: f32[2,16,290], index: 0, kind: input, shape index: {}]
  %s1 = inlined_call_operand.hbm [shape: f32[2,8,256], index: 1, kind: input, shape index: {}]
  %s2 = inlined_call_operand.hbm [shape: bf16[32,144], index: 2, kind: input, shape index: {}]
  %s3 = inlined_call_operand.vmem [shape: f32[3,32,1], index: 3, kind: input, shape index: {}]
  %s4 = inlined_call_operand.vmem [shape: bf16[3,1,256], index: 4, kind: input, shape index: {}]
  %s5 = inlined_call_operand.hbm [shape: f32[3,8,256], index: 5, kind: input, shape index: {}]
  %s6 = inlined_call_operand.hbm [shape: f32[2,8,256], index: 6, kind: output, shape index: {0}]
  %s7 = inlined_call_operand.hbm [shape: f32[2,8,256], index: 7, kind: output, shape index: {1}]
  %8 = xla_tuple %s6, %s7
  %s9 = sld [smem:[#allocation0]]
  $region77: #{tpu_custom_call.1} parent=0
    _
  %s11 = ssub.s32 1, %s9
  %s12 = scalar_select 0, %s11, %s9
  $region1: #{tpu_custom_call.1} parent=0
    #allocation2 [shape = 'u8[16384]{0}', space=vmem, size = 0x4000, scoped, tag = 'input window, operand 1']
    #allocation3 [shape = 's32[2]{0}', space=sflag, size = 0x8, scoped, tag = 'scoped memory for tpu_custom_call.1']
    #allocation4 [shape = 's32[2]{0}', space=sflag, size = 0x8, scoped, tag = 'scoped memory for tpu_custom_call.1']
    #allocation5 [shape = 'u8[16384]{0}', space=vmem, size = 0x4000, scoped, tag = 'input window, operand 2, single buffered']
    #allocation6 [shape = 's32[1]{0}', space=sflag, size = 0x4, scoped, tag = 'scoped memory for tpu_custom_call.1']
    #allocation7 [shape = 'u8[24576]{0}', space=vmem, size = 0x6000, scoped, tag = 'input window, operand 5, single buffered']
    #allocation8 [shape = 'u8[16384]{0}', space=vmem, size = 0x4000, scoped, tag = 'output window, operand 0']
    #allocation9 [shape = 'u8[16384]{0}', space=vmem, size = 0x4000, scoped, tag = 'output window, operand 1']
    #allocation10 [shape = 's32[2]{0}', space=sflag, size = 0x8, scoped, tag = 'scoped memory for tpu_custom_call.1']
    %13 = vsyncpa [#allocation3], 0
    %s14 = scalar_lea.sflag [#allocation3], 1
    %15 = vsyncpa %s14, 0
    %16 = vsyncpa [#allocation6], 0
    %17 = vsyncpa [#allocation4], 0
    %s18 = scalar_lea.sflag [#allocation4], 1
    %19 = vsyncpa %s18, 0
    %20 = vsyncpa [#allocation10], 0
    %s21 = scalar_lea.sflag [#allocation10], 1
    %22 = vsyncpa %s21, 0
    loop: start=0, step=1, limit=4
    $region2: #{tpu_custom_call.1} parent=1 // loop_pre_header
      _
    $region3: #{tpu_custom_call.1} parent=1 // loop_header
      %s24 = sphi 0, %s28
      %p25 = scmp.ge.s32.totalorder %s24, 4
      %s34 = sphi 0, %s36
      %s37 = sphi 0, %s34
      %s38 = sphi 0, %s37
      %s54 = sphi 0, %s38
      %s60 = sphi 0, %s62
      %s63 = sphi 0, %s60
      %s64 = sphi 0, %s63
      %s80 = sphi 0, %s64
      %s84 = sphi 0, %s84
      %s86 = sphi 0, %s84
      %s87 = sphi 0, %s86
      %s101 = sphi 0, %s87
      %s105 = sphi 0, %s105
      %s107 = sphi 0, %s105
      %s108 = sphi 0, %s107
      %s122 = sphi 0, %s108
      %s126 = sphi 0, %s126
      %s128 = sphi 0, %s126
      %s129 = sphi 0, %s128
      %s143 = sphi 0, %s129
      %s147 = sphi 0, %s147
      %s149 = sphi 0, %s147
      %s150 = sphi 0, %s149
      %s164 = sphi 0, %s150
      %s170 = sphi 0, %s172
      %s173 = sphi 0, %s170
      %s174 = sphi 0, %s173
      %s190 = sphi 0, %s174
      %s196 = sphi 0, %s198
      %s199 = sphi 0, %s196
      %s200 = sphi 0, %s199
      %s216 = sphi 0, %s200
    $region4: #{tpu_custom_call.1} parent=1 // loop_header_branch
      %27 = sbr.rel (%p25) target = $region8
    $region5: #{tpu_custom_call.1} parent=1 // loop_body
      %s29 = ssub.s32 %s24, 1
      %s30 = ssub.s32 %s24, 2
      %s31 = sadd.s32 %s24, 1
      %s32 = ssub.s32 %s24, %s31
      %p33 = scmp.eq.s32.totalorder %s32, 0
      %s35 = sadd.s32 %s34, 1
      %s36 = scalar_select %p33, %s34, %s35
      %p39 = pneg %p33
      %p40 = scmp.eq.s32.totalorder %s24, 1
      %p41 = por %p39, %p40
      %p42 = scmp.ne.s32.totalorder %s34, %s37
      %p43 = scmp.eq.s32.totalorder %s24, 0
      %p44 = por %p42, %p43
      %p45 = scmp.ne.s32.totalorder %s34, %s37
      %p46 = scmp.eq.s32.totalorder %s29, 1
      %p47 = por %p45, %p46
      %p48 = scmp.ne.s32.totalorder %s37, %s38
      %p49 = scmp.eq.s32.totalorder %s29, 0
      %p50 = por %p48, %p49
      %p51 = scmp.ne.s32.totalorder %s37, %s38
      %p52 = scmp.eq.s32.totalorder %s30, 1
      %p53 = por %p51, %p52
      %p55 = scmp.ne.s32.totalorder %s38, %s54
      %p56 = scmp.eq.s32.totalorder %s30, 0
      %p57 = por %p55, %p56
      %s58 = ssub.s32 %s24, %s31
      %p59 = scmp.eq.s32.totalorder %s58, 0
      %s61 = sadd.s32 %s60, 1
      %s62 = scalar_select %p59, %s60, %s61
      %p65 = pneg %p59
      %p66 = scmp.eq.s32.totalorder %s24, 1
      %p67 = por %p65, %p66
      %p68 = scmp.ne.s32.totalorder %s60, %s63
      %p69 = scmp.eq.s32.totalorder %s24, 0
      %p70 = por %p68, %p69
      %p71 = scmp.ne.s32.totalorder %s60, %s63
      %p72 = scmp.eq.s32.totalorder %s29, 1
      %p73 = por %p71, %p72
      %p74 = scmp.ne.s32.totalorder %s63, %s64
      %p75 = scmp.eq.s32.totalorder %s29, 0
      %p76 = por %p74, %p75
      %p77 = scmp.ne.s32.totalorder %s63, %s64
      %p78 = scmp.eq.s32.totalorder %s30, 1
      %p79 = por %p77, %p78
      %p81 = scmp.ne.s32.totalorder %s64, %s80
      %p82 = scmp.eq.s32.totalorder %s30, 0
      %p83 = por %p81, %p82
      %s85 = sadd.s32 %s84, 1
      %p88 = scmp.eq.s32.totalorder %s24, 1
      %p89 = scmp.ne.s32.totalorder %s84, %s86
      %p90 = scmp.eq.s32.totalorder %s24, 0
      %p91 = por %p89, %p90
      %p92 = scmp.ne.s32.totalorder %s84, %s86
      %p93 = scmp.eq.s32.totalorder %s29, 1
      %p94 = por %p92, %p93
      %p95 = scmp.ne.s32.totalorder %s86, %s87
      %p96 = scmp.eq.s32.totalorder %s29, 0
      %p97 = por %p95, %p96
      %p98 = scmp.ne.s32.totalorder %s86, %s87
      %p99 = scmp.eq.s32.totalorder %s30, 1
      %p100 = por %p98, %p99
      %p102 = scmp.ne.s32.totalorder %s87, %s101
      %p103 = scmp.eq.s32.totalorder %s30, 0
      %p104 = por %p102, %p103
      %s106 = sadd.s32 %s105, 1
      %p109 = scmp.eq.s32.totalorder %s24, 1
      %p110 = scmp.ne.s32.totalorder %s105, %s107
      %p111 = scmp.eq.s32.totalorder %s24, 0
      %p112 = por %p110, %p111
      %p113 = scmp.ne.s32.totalorder %s105, %s107
      %p114 = scmp.eq.s32.totalorder %s29, 1
      %p115 = por %p113, %p114
      %p116 = scmp.ne.s32.totalorder %s107, %s108
      %p117 = scmp.eq.s32.totalorder %s29, 0
      %p118 = por %p116, %p117
      %p119 = scmp.ne.s32.totalorder %s107, %s108
      %p120 = scmp.eq.s32.totalorder %s30, 1
      %p121 = por %p119, %p120
      %p123 = scmp.ne.s32.totalorder %s108, %s122
      %p124 = scmp.eq.s32.totalorder %s30, 0
      %p125 = por %p123, %p124
      %s127 = sadd.s32 %s126, 1
      %p130 = scmp.eq.s32.totalorder %s24, 1
      %p131 = scmp.ne.s32.totalorder %s126, %s128
      %p132 = scmp.eq.s32.totalorder %s24, 0
      %p133 = por %p131, %p132
      %p134 = scmp.ne.s32.totalorder %s126, %s128
      %p135 = scmp.eq.s32.totalorder %s29, 1
      %p136 = por %p134, %p135
      %p137 = scmp.ne.s32.totalorder %s128, %s129
      %p138 = scmp.eq.s32.totalorder %s29, 0
      %p139 = por %p137, %p138
      %p140 = scmp.ne.s32.totalorder %s128, %s129
      %p141 = scmp.eq.s32.totalorder %s30, 1
      %p142 = por %p140, %p141
      %p144 = scmp.ne.s32.totalorder %s129, %s143
      %p145 = scmp.eq.s32.totalorder %s30, 0
      %p146 = por %p144, %p145
      %s148 = sadd.s32 %s147, 1
      %p151 = scmp.eq.s32.totalorder %s24, 1
      %p152 = scmp.ne.s32.totalorder %s147, %s149
      %p153 = scmp.eq.s32.totalorder %s24, 0
      %p154 = por %p152, %p153
      %p155 = scmp.ne.s32.totalorder %s147, %s149
      %p156 = scmp.eq.s32.totalorder %s29, 1
      %p157 = por %p155, %p156
      %p158 = scmp.ne.s32.totalorder %s149, %s150
      %p159 = scmp.eq.s32.totalorder %s29, 0
      %p160 = por %p158, %p159
      %p161 = scmp.ne.s32.totalorder %s149, %s150
      %p162 = scmp.eq.s32.totalorder %s30, 1
      %p163 = por %p161, %p162
      %p165 = scmp.ne.s32.totalorder %s150, %s164
      %p166 = scmp.eq.s32.totalorder %s30, 0
      %p167 = por %p165, %p166
      %s168 = ssub.s32 %s24, %s31
      %p169 = scmp.eq.s32.totalorder %s168, 0
      %s171 = sadd.s32 %s170, 1
      %s172 = scalar_select %p169, %s170, %s171
      %p175 = pneg %p169
      %p176 = scmp.eq.s32.totalorder %s24, 1
      %p177 = por %p175, %p176
      %p178 = scmp.ne.s32.totalorder %s170, %s173
      %p179 = scmp.eq.s32.totalorder %s24, 0
      %p180 = por %p178, %p179
      %p181 = scmp.ne.s32.totalorder %s170, %s173
      %p182 = scmp.eq.s32.totalorder %s29, 1
      %p183 = por %p181, %p182
      %p184 = scmp.ne.s32.totalorder %s173, %s174
      %p185 = scmp.eq.s32.totalorder %s29, 0
      %p186 = por %p184, %p185
      %p187 = scmp.ne.s32.totalorder %s173, %s174
      %p188 = scmp.eq.s32.totalorder %s30, 1
      %p189 = por %p187, %p188
      %p191 = scmp.ne.s32.totalorder %s174, %s190
      %p192 = scmp.eq.s32.totalorder %s30, 0
      %p193 = por %p191, %p192
      %s194 = ssub.s32 %s24, %s31
      %p195 = scmp.eq.s32.totalorder %s194, 0
      %s197 = sadd.s32 %s196, 1
      %s198 = scalar_select %p195, %s196, %s197
      %p201 = pneg %p195
      %p202 = scmp.eq.s32.totalorder %s24, 1
      %p203 = por %p201, %p202
      %p204 = scmp.ne.s32.totalorder %s196, %s199
      %p205 = scmp.eq.s32.totalorder %s24, 0
      %p206 = por %p204, %p205
      %p207 = scmp.ne.s32.totalorder %s196, %s199
      %p208 = scmp.eq.s32.totalorder %s29, 1
      %p209 = por %p207, %p208
      %p210 = scmp.ne.s32.totalorder %s199, %s200
      %p211 = scmp.eq.s32.totalorder %s29, 0
      %p212 = por %p210, %p211
      %p213 = scmp.ne.s32.totalorder %s199, %s200
      %p214 = scmp.eq.s32.totalorder %s30, 1
      %p215 = por %p213, %p214
      %p217 = scmp.ne.s32.totalorder %s200, %s216
      %p218 = scmp.eq.s32.totalorder %s30, 0
      %p219 = por %p217, %p218
      %p220 = scmp.le.s32.totalorder 1, %s24
      %p221 = scmp.lt.s32.totalorder %s24, 3
      %p222 = pnand %p220, %p221
      %p223 = pneg %p222
      // Predicated region
      $region9: #{tpu_custom_call.1} parent=5 // pred_check
        _
      $region10: #{tpu_custom_call.1} parent=5 // pred_check_branch
        %225 = sbr.rel (%p222) target = $region12
      $region11: #{tpu_custom_call.1} parent=5 // pred_region
        %s226 = ssub.s32 %s24, 1
        // Predicated region
        $region13: #{tpu_custom_call.1} parent=11 // pred_check
          %p227 = pneg %p97
        $region14: #{tpu_custom_call.1} parent=11 // pred_check_branch
          %229 = sbr.rel (%p227) target = $region16
        $region15: #{tpu_custom_call.1} parent=11 // pred_region
          %s231 = ssub.s32 512, 512
          %232 = vsyncadd [#allocation6], %s231
          %s233 = sshll.u32 [#allocation5], 4
          %s234 = int_to_ptr.vmem [resolvable:$true] %s233
          %239 = dma.hbm_to_vmem [thread:$0]  %s2, 512, %s234, [#allocation6], 128, 128, 8
        $region16: #{tpu_custom_call.1} parent=11 // pred_fallthru
          _
        // Predicated region
        $region17: #{tpu_custom_call.1} parent=11 // pred_check
          %p240 = pneg %p118
        $region18: #{tpu_custom_call.1} parent=11 // pred_check_branch
          %242 = sbr.rel (%p240) target = $region20
        $region19: #{tpu_custom_call.1} parent=11 // pred_region
          _
        $region20: #{tpu_custom_call.1} parent=11 // pred_fallthru
          _
        // Predicated region
        $region21: #{tpu_custom_call.1} parent=11 // pred_check
          %p243 = pneg %p139
        $region22: #{tpu_custom_call.1} parent=11 // pred_check_branch
          %245 = sbr.rel (%p243) target = $region24
        $region23: #{tpu_custom_call.1} parent=11 // pred_region
          _
        $region24: #{tpu_custom_call.1} parent=11 // pred_fallthru
          _
        // Predicated region
        $region25: #{tpu_custom_call.1} parent=11 // pred_check
          %p246 = pneg %p160
        $region26: #{tpu_custom_call.1} parent=11 // pred_check_branch
          %248 = sbr.rel (%p246) target = $region28
        $region27: #{tpu_custom_call.1} parent=11 // pred_region
          %s250 = ssub.s32 768, 768
          %251 = vsyncadd [#allocation6], %s250
          %s252 = sshll.u32 [#allocation7], 4
          %s253 = int_to_ptr.vmem [resolvable:$true] %s252
          %258 = dma.hbm_to_vmem [thread:$0]  %s5, 768, %s253, [#allocation6], 256, 256, 16
        $region28: #{tpu_custom_call.1} parent=11 // pred_fallthru
          _
      $region12: #{tpu_custom_call.1} parent=5 // pred_fallthru
        _
      %p259 = scmp.lt.s32.totalorder %s24, 2
      // Predicated region
      $region29: #{tpu_custom_call.1} parent=5 // pred_check
        %p260 = pneg %p259
      $region30: #{tpu_custom_call.1} parent=5 // pred_check_branch
        %262 = sbr.rel (%p260) target = $region32
      $region31: #{tpu_custom_call.1} parent=5 // pred_region
        // Predicated region
        $region33: #{tpu_custom_call.1} parent=31 // pred_check
          %p263 = pneg %p44
        $region34: #{tpu_custom_call.1} parent=31 // pred_check_branch
          %265 = sbr.rel (%p263) target = $region36
        $region35: #{tpu_custom_call.1} parent=31 // pred_region
          %p266 = scmp.lt.s32.totalorder %s24, 1
          %s267 = scalar_select %p266, %s24, 1
          %s268 = smul.addr %s267, 6
          %s269 = smul.addr %s268, 8
          %s270 = scalar_lea.vmem %s0, %s269
        $region36: #{tpu_custom_call.1} parent=31 // pred_fallthru
          _
        // Predicated region
        $region37: #{tpu_custom_call.1} parent=31 // pred_check
          %p271 = pneg %p70
        $region38: #{tpu_custom_call.1} parent=31 // pred_check_branch
          %273 = sbr.rel (%p271) target = $region40
        $region39: #{tpu_custom_call.1} parent=31 // pred_region
          %s274 = sand.u32 %s60, 1
          %s275 = scalar_lea.sflag [#allocation3], %s274
          %s276 = sand.u32 %s60, 1
          %s277 = smul.addr %s276, 16
          %s278 = scalar_lea.vmem [#allocation2], %s277
          %s280 = ssub.s32 256, 256
          %281 = vsyncadd %s275, %s280
          %s282 = smul.addr %s24, 2
          %s283 = smul.addr %s282, 128
          %s284 = scalar_lea.hbm %s1, %s283
          %s286 = sshll.u32 %s278, 4
          %s287 = int_to_ptr.vmem [resolvable:$true] %s286
          %289 = dma.hbm_to_vmem [thread:$0]  %s284, 256, %s287, %s275
        $region40: #{tpu_custom_call.1} parent=31 // pred_fallthru
          _
      $region32: #{tpu_custom_call.1} parent=5 // pred_fallthru
        _
      %p290 = scmp.le.s32.totalorder 1, %s24
      %p291 = scmp.lt.s32.totalorder %s24, 3
      %p292 = pnand %p290, %p291
      %p293 = pneg %p292
      // Predicated region
      $region41: #{tpu_custom_call.1} parent=5 // pred_check
        _
      $region42: #{tpu_custom_call.1} parent=5 // pred_check_branch
        %295 = sbr.rel (%p292) target = $region44
      $region43: #{tpu_custom_call.1} parent=5 // pred_region
        %s296 = ssub.s32 %s24, 1
        %s297 = sand.u32 %s63, 1
        %s298 = scalar_lea.sflag [#allocation3], %s297
        %s299 = sand.u32 %s63, 1
        %s300 = smul.addr %s299, 16
        %s301 = scalar_lea.vmem [#allocation2], %s300
        // Predicated region
        $region45: #{tpu_custom_call.1} parent=43 // pred_check
          %p302 = pneg %p76
        $region46: #{tpu_custom_call.1} parent=43 // pred_check_branch
          %304 = sbr.rel (%p302) target = $region48
        $region47: #{tpu_custom_call.1} parent=43 // pred_region
          %305 = dma.done %s298, 256
        $region48: #{tpu_custom_call.1} parent=43 // pred_fallthru
          _
        // Predicated region
        $region49: #{tpu_custom_call.1} parent=43 // pred_check
          %p306 = pneg %p97
        $region50: #{tpu_custom_call.1} parent=43 // pred_check_branch
          %308 = sbr.rel (%p306) target = $region52
        $region51: #{tpu_custom_call.1} parent=43 // pred_region
          %309 = dma.done [#allocation6], 512
        $region52: #{tpu_custom_call.1} parent=43 // pred_fallthru
          _
        // Predicated region
        $region53: #{tpu_custom_call.1} parent=43 // pred_check
          %p310 = pneg %p160
        $region54: #{tpu_custom_call.1} parent=43 // pred_check_branch
          %312 = sbr.rel (%p310) target = $region56
        $region55: #{tpu_custom_call.1} parent=43 // pred_region
          %313 = dma.done [#allocation6], 768
        $region56: #{tpu_custom_call.1} parent=43 // pred_fallthru
          _
        %p314 = scmp.lt.s32.totalorder %s29, 1
        %s315 = scalar_select %p314, %s29, 1
        %s316 = smul.addr %s315, 6
        %s317 = smul.addr %s316, 8
        %s318 = scalar_lea.vmem %s0, %s317
        %p319 = pneg %p50
        %p320 = pneg %p47
        %s321 = sand.u32 %s63, 1
        %s322 = scalar_lea.sflag [#allocation3], %s321
        %s323 = sand.u32 %s63, 1
        %s324 = smul.addr %s323, 16
        %s325 = scalar_lea.vmem [#allocation2], %s324
        %p326 = pneg %p76
        %p327 = pneg %p73
        %p328 = pneg %p97
        %p329 = pneg %p94
        %p330 = pneg %p118
        %p331 = pneg %p115
        %p332 = pneg %p139
        %p333 = pneg %p136
        %p334 = pneg %p160
        %p335 = pneg %p157
        %p336 = pneg %p186
        %p337 = pneg %p183
        %s338 = sand.u32 %s173, 1
        %s339 = scalar_lea.sflag [#allocation4], %s338
        %s340 = sand.u32 %s173, 1
        %s341 = smul.addr %s340, 16
        %s342 = scalar_lea.vmem [#allocation8], %s341
        %p343 = pneg %p212
        %p344 = pneg %p209
        %s345 = sand.u32 %s199, 1
        %s346 = scalar_lea.sflag [#allocation10], %s345
        %s347 = sand.u32 %s199, 1
        %s348 = smul.addr %s347, 16
        %s349 = scalar_lea.vmem [#allocation9], %s348
        %p350 = scmp.lt.s32.totalorder %s29, 1
        %s351 = scalar_select %p350, %s29, 1
        %s352 = smul.addr %s351, 6
        %s353 = smul.addr %s352, 8
        %s354 = scalar_lea.vmem %s0, %s353
        %v356 = vld [vmem:[%s4] sm:$0x3]
        %v357 = vld [vmem:[%s354] sm:$0xff]
        %v358 = vld [vmem:[%s354 + $0x8] sm:$0xff]
        %v359 = vld [vmem:[%s354 + $0x18] sm:$0xff]
        %v360 = vld [vmem:[%s354 + $0x20] sm:$0xff]
        %v361 = vpack.c.bf16 %v359, %v357
        %v362 = vpack.c.bf16 %v360, %v358
        %v365 = vunpack.c.l.s4 1966171168
        %v366 = vunpack.c.0.s8 %v365
        %v367 = vlaneseq
        %v368 = vshrl.u32 %v367, 7
        %v369 = vsub.s32 %v366, %v368
        %v370 = vrot.slane %v356, %v369
        %v371 = vcombine.high %v370, %v370
        %v373 = vunpack.c.l.s4 1966171168
        %v374 = vunpack.c.0.s8 %v373
        %v375 = vlaneseq
        %v376 = vshrl.u32 %v375, 7
        %v377 = vsub.s32 %v374, %v376
        %v378 = vrot.slane %v370, %v377
        %v380 = vunpack.c.l.s4 1966171168
        %v381 = vunpack.c.0.s8 %v380
        %v382 = vlaneseq
        %v383 = vshrl.u32 %v382, 7
        %v384 = vsub.s32 %v381, %v383
        %v385 = vrot.slane %v371, %v384
        %v387 = vpack.i.b16 %v378, %v378
        %v389 = vlaneseq
        %v390 = vshrl.u32 %v389, 7
        %v391 = vsub.s32 0, %v390
        %v392 = vrot.slane %v387, %v391
        %v394 = vpack.i.b16 %v385, %v385
        %v396 = vlaneseq
        %v397 = vshrl.u32 %v396, 7
        %v398 = vsub.s32 0, %v397
        %v399 = vrot.slane %v394, %v398
        %v400 = vmul.bf16 %v361, %v392
        %v401 = vmul.bf16 %v362, %v399
        %v402 = vld [vmem:[%s354 + $0x10] sm:$0xff]
        %v403 = vld [vmem:[%s354 + $0x28] sm:$0xff]
        %v404 = vpack.c.bf16 %v403, %v402
        %s405 = scalar_lea.vmem %s4, 4
        %v406 = vld [vmem:[%s405] sm:$0x3]
        %v409 = vunpack.c.l.s4 1966171168
        %v410 = vunpack.c.0.s8 %v409
        %v411 = vlaneseq
        %v412 = vshrl.u32 %v411, 7
        %v413 = vsub.s32 %v410, %v412
        %v414 = vrot.slane %v406, %v413
        %v415 = vcombine.high %v414, %v414
        %v417 = vunpack.c.l.s4 1966171168
        %v418 = vunpack.c.0.s8 %v417
        %v419 = vlaneseq
        %v420 = vshrl.u32 %v419, 7
        %v421 = vsub.s32 %v418, %v420
        %v422 = vrot.slane %v414, %v421
        %v424 = vunpack.c.l.s4 1966171168
        %v425 = vunpack.c.0.s8 %v424
        %v426 = vlaneseq
        %v427 = vshrl.u32 %v426, 7
        %v428 = vsub.s32 %v425, %v427
        %v429 = vrot.slane %v415, %v428
        %v431 = vpack.i.b16 %v422, %v422
        %v433 = vlaneseq
        %v434 = vshrl.u32 %v433, 7
        %v435 = vsub.s32 0, %v434
        %v436 = vrot.slane %v431, %v435
        %v438 = vpack.i.b16 %v429, %v429
        %v440 = vlaneseq
        %v441 = vshrl.u32 %v440, 7
        %v442 = vsub.s32 0, %v441
        %v443 = vrot.slane %v438, %v442
        %446 = vrot.lane.b32.xlu0 %v436, 2
        %v447 = vpop.permute.xlu0 %446
        %448 = vrot.lane.b32.xlu0 %v443, 2
        %v449 = vpop.permute.xlu0 %448
        %vm450 = vcmask 15360
        %v451 = vsel %vm450, %v447, %v449
        %v455 = vmul.bf16 %v361, %v447
        %v456 = vmul.bf16 %v362, %v451
        %v457 = vmul.bf16 %v404, %v449
        %460 = vrot.lane.b32.xlu0 %v392, 16
        %v461 = vpop.permute.xlu0 %460
        %462 = vrot.lane.b32.xlu0 %v399, 16
        %v463 = vpop.permute.xlu0 %462
        %vm464 = vcmask 130048
        %v465 = vsel %vm464, %v461, %v463
        %v469 = vmul.bf16 %v361, %v461
        %v470 = vmul.bf16 %v362, %v465
        %v471 = vmul.bf16 %v404, %v463
        %472 = vrot.lane.b32.xlu0 %v436, 18
        %v473 = vpop.permute.xlu0 %472
        %474 = vrot.lane.b32.xlu0 %v443, 18
        %v475 = vpop.permute.xlu0 %474
        %vm476 = vcmask 146432
        %v477 = vsel %vm476, %v473, %v475
        %v481 = vmul.bf16 %v361, %v473
        %v482 = vmul.bf16 %v362, %v477
        %v483 = vmul.bf16 %v404, %v475
        %484 = vrot.lane.b32.xlu0 %v392, 32
        %v485 = vpop.permute.xlu0 %484
        %486 = vrot.lane.b32.xlu0 %v399, 32
        %v487 = vpop.permute.xlu0 %486
        %vm488 = vcmask 261120
        %v489 = vsel %vm488, %v485, %v487
        %v493 = vmul.bf16 %v361, %v485
        %v494 = vmul.bf16 %v362, %v489
        %v495 = vmul.bf16 %v404, %v487
        %496 = vrot.lane.b32.xlu0 %v436, 34
        %v497 = vpop.permute.xlu0 %496
        %498 = vrot.lane.b32.xlu0 %v443, 34
        %v499 = vpop.permute.xlu0 %498
        %vm500 = vcmask 277504
        %v501 = vsel %vm500, %v497, %v499
        %v505 = vmul.bf16 %v361, %v497
        %v506 = vmul.bf16 %v362, %v501
        %v507 = vmul.bf16 %v404, %v499
        %511 = vrot.lane.b32.xlu0 %v361, 127
        %v512 = vpop.permute.xlu0 %511
        %513 = vrot.lane.b32.xlu0 %v362, 127
        %v514 = vpop.permute.xlu0 %513
        %515 = vrot.lane.b32.xlu0 %v404, 127
        %v516 = vpop.permute.xlu0 %515
        %vm517 = vcmask 1039360
        %v518 = vsel %vm517, %v512, %v514
        %v519 = vsel %vm517, %v514, %v516
        %525 = vrot.lane.b32.xlu0 %v455, 126
        %v526 = vpop.permute.xlu0 %525
        %527 = vrot.lane.b32.xlu0 %v456, 126
        %v528 = vpop.permute.xlu0 %527
        %529 = vrot.lane.b32.xlu0 %v457, 126
        %v530 = vpop.permute.xlu0 %529
        %vm531 = vcmask 1031168
        %v532 = vsel %vm531, %v526, %v528
        %v533 = vsel %vm531, %v528, %v530
        %539 = vrot.lane.b32.xlu0 %v469, 112
        %v540 = vpop.permute.xlu0 %539
        %541 = vrot.lane.b32.xlu0 %v470, 112
        %v542 = vpop.permute.xlu0 %541
        %543 = vrot.lane.b32.xlu0 %v471, 112
        %v544 = vpop.permute.xlu0 %543
        %vm545 = vcmask 916480
        %v546 = vsel %vm545, %v540, %v542
        %v547 = vsel %vm545, %v542, %v544
        %550 = vrot.lane.b32.xlu0 %v361, 111
        %v551 = vpop.permute.xlu0 %550
        %552 = vrot.lane.b32.xlu0 %v362, 111
        %v553 = vpop.permute.xlu0 %552
        %554 = vrot.lane.b32.xlu0 %v404, 111
        %v555 = vpop.permute.xlu0 %554
        %vm556 = vcmask 908288
        %v557 = vsel %vm556, %v551, %v553
        %v558 = vsel %vm556, %v553, %v555
        %564 = vrot.lane.b32.xlu0 %v481, 110
        %v565 = vpop.permute.xlu0 %564
        %566 = vrot.lane.b32.xlu0 %v482, 110
        %v567 = vpop.permute.xlu0 %566
        %568 = vrot.lane.b32.xlu0 %v483, 110
        %v569 = vpop.permute.xlu0 %568
        %vm570 = vcmask 900096
        %v571 = vsel %vm570, %v565, %v567
        %v572 = vsel %vm570, %v567, %v569
        %578 = vrot.lane.b32.xlu0 %v493, 96
        %v579 = vpop.permute.xlu0 %578
        %580 = vrot.lane.b32.xlu0 %v494, 96
        %v581 = vpop.permute.xlu0 %580
        %582 = vrot.lane.b32.xlu0 %v495, 96
        %v583 = vpop.permute.xlu0 %582
        %vm584 = vcmask 785408
        %v585 = vsel %vm584, %v579, %v581
        %v586 = vsel %vm584, %v581, %v583
        %589 = vrot.lane.b32.xlu0 %v361, 95
        %v590 = vpop.permute.xlu0 %589
        %591 = vrot.lane.b32.xlu0 %v362, 95
        %v592 = vpop.permute.xlu0 %591
        %593 = vrot.lane.b32.xlu0 %v404, 95
        %v594 = vpop.permute.xlu0 %593
        %vm595 = vcmask 777216
        %v596 = vsel %vm595, %v590, %v592
        %v597 = vsel %vm595, %v592, %v594
        %603 = vrot.lane.b32.xlu0 %v505, 94
        %v604 = vpop.permute.xlu0 %603
        %605 = vrot.lane.b32.xlu0 %v506, 94
        %v606 = vpop.permute.xlu0 %605
        %607 = vrot.lane.b32.xlu0 %v507, 94
        %v608 = vpop.permute.xlu0 %607
        %vm609 = vcmask 769024
        %v610 = vsel %vm609, %v604, %v606
        %v611 = vsel %vm609, %v606, %v608
        %v614 = vld [vmem:[#allocation5] sm:$0xff]
        %v615 = vld [vmem:[#allocation5 + $0x8] sm:$0xff]
        %v616 = vld [vmem:[#allocation5 + $0x10] sm:$0xff]
        %v617 = vld [vmem:[#allocation5 + $0x18] sm:$0xff]
        %v622 = vunpack.c.l.b16 %v614
        %v623 = vunpack.c.h.b16 %v614
        %v624 = vunpack.c.l.b16 %v615
        %v625 = vunpack.c.h.b16 %v615
        %v626 = vunpack.c.l.b16 %v616
        %v627 = vunpack.c.h.b16 %v616
        %v628 = vunpack.c.l.b16 %v617
        %v629 = vunpack.c.h.b16 %v617
        %v630 = vpack.c.b16 %v624, %v622
        %v631 = vpack.c.b16 %v625, %v623
        %v632 = vpack.c.b16 %v628, %v626
        %v633 = vpack.c.b16 %v629, %v627
        %vm636 = vcmask 130048
        %v638 = vsel %vm636, %v631, 0
        %v641 = vsel %vm636, %v633, 0
        %643 = vmatprep.subr.bf16.mxu0 %v401
        %644 = vmatpush1.bf16.msra.mxu0 %v400
        %645 = vmatprep.subr.bf16.mxu0 %v519
        %646 = vmatpush1.bf16.msra.mxu0 %v518
        %647 = vmatprep.subr.bf16.mxu0 %v533
        %648 = vmatpush1.bf16.msra.mxu0 %v532
        %649 = vmatprep.subr.bf16.mxu0 %v547
        %650 = vmatpush1.bf16.msra.mxu0 %v546
        %651 = vmatprep.subr.bf16.mxu0 %v558
        %652 = vmatpush1.bf16.msra.mxu0 %v557
        %653 = vmatprep.subr.bf16.mxu0 %v572
        %654 = vmatpush1.bf16.msra.mxu0 %v571
        %655 = vmatprep.subr.bf16.mxu0 %v586
        %656 = vmatpush1.bf16.msra.mxu0 %v585
        %657 = vmatprep.subr.bf16.mxu0 %v597
        %658 = vmatpush1.bf16.msra.mxu0 %v596
        %659 = vmatprep.subr.bf16.mxu0 %v611
        %660 = vmatpush1.bf16.msra.mxu0 %v610
        %661 = vmatprep.subr.bf16.mxu0 0
        %662 = vmatpush1.bf16.msra.mxu0 0
        %663 = vmatprep.subr.bf16.mxu0 0
        %664 = vmatpush1.bf16.msra.mxu0 0
        %665 = vmatprep.subr.bf16.mxu0 0
        %666 = vmatpush1.bf16.msra.mxu0 0
        %667 = vmatprep.subr.bf16.mxu0 0
        %668 = vmatpush1.bf16.msra.mxu0 0
        %669 = vmatprep.subr.bf16.mxu0 0
        %670 = vmatpush1.bf16.msra.mxu0 0
        %671 = vmatprep.subr.bf16.mxu0 0
        %672 = vmatpush1.bf16.msra.mxu0 0
        %673 = vmatprep.subr.bf16.mxu0 0
        %674 = vmatpush1.bf16.msra.mxu0 0
        %675 = vmatprep.mubr.bf16.mxu0 %v638
        %676 = vmatmul.mubr.bf16.gmra.mrb[0].mxu0 %v630
        %v677 = vpop.f32.mrb[0].mxu0
        %v678 = vadd.f32 0.0, %v677
        %v679 = vpop.f32.mrb[0].mxu0
        %v680 = vadd.f32 0.0, %v679
        %v681 = vpop.f32.mrb[0].mxu0
        %v682 = vadd.f32 0.0, %v681
        %v683 = vpop.f32.mrb[0].mxu0
        %v684 = vadd.f32 0.0, %v683
        %685 = vmatprep.mubr.bf16.mxu0 %v641
        %686 = vmatmul.mubr.bf16.gmra.mrb[0].mxu0 %v632
        %v687 = vpop.f32.mrb[0].mxu0
        %v688 = vadd.f32 0.0, %v687
        %v689 = vpop.f32.mrb[0].mxu0
        %v690 = vadd.f32 0.0, %v689
        %v691 = vpop.f32.mrb[0].mxu0
        %v692 = vadd.f32 0.0, %v691
        %v693 = vpop.f32.mrb[0].mxu0
        %v694 = vadd.f32 0.0, %v693
        %695 = vdwg.mxu0
        %v696 = vld [vmem:[%s3] sm:$0xff]
        %v697 = vld [vmem:[%s3 + $0x8] sm:$0xff]
        %v698 = vld [vmem:[%s3 + $0x10] sm:$0xff]
        %v699 = vld [vmem:[%s3 + $0x18] sm:$0xff]
        %s700 = scalar_lea.vmem %s3, 32
        %v701 = vld [vmem:[%s700] sm:$0xff]
        %v702 = vld [vmem:[%s700 + $0x8] sm:$0xff]
        %v703 = vld [vmem:[%s700 + $0x10] sm:$0xff]
        %v704 = vld [vmem:[%s700 + $0x18] sm:$0xff]
        %s705 = scalar_lea.vmem %s3, 64
        %v706 = vld [vmem:[%s705] sm:$0xff]
        %v707 = vld [vmem:[%s705 + $0x8] sm:$0xff]
        %v708 = vld [vmem:[%s705 + $0x10] sm:$0xff]
        %v709 = vld [vmem:[%s705 + $0x18] sm:$0xff]
        %v710 = vld [vmem:[#allocation7] sm:$0xff]
        %v711 = vld [vmem:[#allocation7 + $0x8] sm:$0xff]
        %s712 = scalar_lea.vmem [#allocation7], 16
        %v713 = vld [vmem:[%s712] sm:$0xff]
        %v714 = vld [vmem:[%s712 + $0x8] sm:$0xff]
        %s715 = scalar_lea.vmem [#allocation7], 32
        %v716 = vld [vmem:[%s715] sm:$0xff]
        %v717 = vld [vmem:[%s715 + $0x8] sm:$0xff]
        %v718 = vadd.f32 %v678, %v680
        %719 = vadd.xlane.f32.xlu0 %v718
        %v720 = vpop.xlane.xlu0 %719
        %v721 = vadd.f32 %v682, %v684
        %722 = vadd.xlane.f32.xlu0 %v721
        %v723 = vpop.xlane.xlu0 %722
        %v724 = vadd.f32 %v688, %v690
        %725 = vadd.xlane.f32.xlu0 %v724
        %v726 = vpop.xlane.xlu0 %725
        %v727 = vadd.f32 %v692, %v694
        %728 = vadd.xlane.f32.xlu0 %v727
        %v729 = vpop.xlane.xlu0 %728
        %v730 = vmul.f32 %v678, %v678
        %v731 = vmul.f32 %v680, %v680
        %v732 = vmul.f32 %v682, %v682
        %v733 = vmul.f32 %v684, %v684
        %v734 = vmul.f32 %v688, %v688
        %v735 = vmul.f32 %v690, %v690
        %v736 = vmul.f32 %v692, %v692
        %v737 = vmul.f32 %v694, %v694
        %v738 = vadd.f32 %v730, %v731
        %739 = vadd.xlane.f32.xlu0 %v738
        %v740 = vpop.xlane.xlu0 %739
        %v741 = vadd.f32 %v732, %v733
        %742 = vadd.xlane.f32.xlu0 %v741
        %v743 = vpop.xlane.xlu0 %742
        %v744 = vadd.f32 %v734, %v735
        %745 = vadd.xlane.f32.xlu0 %v744
        %v746 = vpop.xlane.xlu0 %745
        %v747 = vadd.f32 %v736, %v737
        %748 = vadd.xlane.f32.xlu0 %v747
        %v749 = vpop.xlane.xlu0 %748
        %v750 = vld [vmem:[%s301] sm:$0xff]
        %v751 = vld [vmem:[%s301 + $0x8] sm:$0xff]
        %vm752 = vcmask 7168
        %v753 = vsel %vm752, %v720, 0.0
        %754 = vadd.xlane.f32.xlu0 %v753
        %v755 = vpop.xlane.xlu0 %754
        %v756 = vrot.slane %v755, 4
        %v757 = vadd.f32 %v755, %v756
        %v758 = vrot.slane %v757, 2
        %v759 = vadd.f32 %v757, %v758
        %v760 = vrot.slane %v759, 1
        %v761 = vadd.f32 %v759, %v760
        %s762 = vtos %v761
        %v763 = vsel %vm752, %v696, 0.0
        %764 = vadd.xlane.f32.xlu0 %v763
        %v765 = vpop.xlane.xlu0 %764
        %v766 = vrot.slane %v765, 4
        %v767 = vadd.f32 %v765, %v766
        %v768 = vrot.slane %v767, 2
        %v769 = vadd.f32 %v767, %v768
        %v770 = vrot.slane %v769, 1
        %v771 = vadd.f32 %v769, %v770
        %s772 = vtos %v771
        %s773 = smul.f32 %s772, 256.0
        %s774 = sadd.f32 %s762, %s773
        %v775 = vmul.f32 %v696, 2.0
        %v776 = vmul.f32 %v775, %v720
        %v777 = vadd.f32 %v740, %v776
        %v778 = vmul.f32 %v696, %v696
        %v779 = vmul.f32 %v778, 256.0
        %v780 = vadd.f32 %v777, %v779
        %v781 = vsel %vm752, %v780, 0.0
        %782 = vadd.xlane.f32.xlu0 %v781
        %v783 = vpop.xlane.xlu0 %782
        %v784 = vrot.slane %v783, 4
        %v785 = vadd.f32 %v783, %v784
        %v786 = vrot.slane %v785, 2
        %v787 = vadd.f32 %v785, %v786
        %v788 = vrot.slane %v787, 1
        %v789 = vadd.f32 %v787, %v788
        %s790 = vtos %v789
        %s791 = smul.f32 %s774, 0.00048828125
        %s792 = smul.f32 %s790, 0.00048828125
        %s793 = smul.f32 %s791, %s791
        %s794 = ssub.f32 %s792, %s793
        %s795 = sadd.f32 %s794, 1e-05
        %v796 = vstv %s795
        %v797 = vrsqrt.pop %v796
        %s798 = vtos %v797
        %v799 = vstv %s798
        %v800 = vmul.f32 %v799, %v701
        %v801 = vstv %s791
        %v802 = vsub.f32 %v696, %v801
        %v803 = vmul.f32 %v802, %v800
        %v804 = vadd.f32 %v706, %v803
        %806 = vset.pattern.permute.xlu0 0
        %807 = vperm.xlu0 %806, %v800
        %v808 = vpop.permute.xlu0 %807
        %v810 = vmul.f32 %v678, %v808
        %v811 = vmul.f32 %v680, %v808
        %813 = vset.pattern.permute.xlu0 0
        %814 = vperm.xlu0 %813, %v804
        %v815 = vpop.permute.xlu0 %814
        %v817 = vadd.f32 %v810, %v815
        %v818 = vadd.f32 %v811, %v815
        %v819 = vsel %vm752, %v723, 0.0
        %820 = vadd.xlane.f32.xlu0 %v819
        %v821 = vpop.xlane.xlu0 %820
        %v822 = vrot.slane %v821, 4
        %v823 = vadd.f32 %v821, %v822
        %v824 = vrot.slane %v823, 2
        %v825 = vadd.f32 %v823, %v824
        %v826 = vrot.slane %v825, 1
        %v827 = vadd.f32 %v825, %v826
        %s828 = vtos %v827
        %v829 = vsel %vm752, %v697, 0.0
        %830 = vadd.xlane.f32.xlu0 %v829
        %v831 = vpop.xlane.xlu0 %830
        %v832 = vrot.slane %v831, 4
        %v833 = vadd.f32 %v831, %v832
        %v834 = vrot.slane %v833, 2
        %v835 = vadd.f32 %v833, %v834
        %v836 = vrot.slane %v835, 1
        %v837 = vadd.f32 %v835, %v836
        %s838 = vtos %v837
        %s839 = smul.f32 %s838, 256.0
        %s840 = sadd.f32 %s828, %s839
        %v841 = vmul.f32 %v697, 2.0
        %v842 = vmul.f32 %v841, %v723
        %v843 = vadd.f32 %v743, %v842
        %v844 = vmul.f32 %v697, %v697
        %v845 = vmul.f32 %v844, 256.0
        %v846 = vadd.f32 %v843, %v845
        %v847 = vsel %vm752, %v846, 0.0
        %848 = vadd.xlane.f32.xlu0 %v847
        %v849 = vpop.xlane.xlu0 %848
        %v850 = vrot.slane %v849, 4
        %v851 = vadd.f32 %v849, %v850
        %v852 = vrot.slane %v851, 2
        %v853 = vadd.f32 %v851, %v852
        %v854 = vrot.slane %v853, 1
        %v855 = vadd.f32 %v853, %v854
        %s856 = vtos %v855
        %s857 = smul.f32 %s840, 0.00048828125
        %s858 = smul.f32 %s856, 0.00048828125
        %s859 = smul.f32 %s857, %s857
        %s860 = ssub.f32 %s858, %s859
        %s861 = sadd.f32 %s860, 1e-05
        %v862 = vstv %s861
        %v863 = vrsqrt.pop %v862
        %s864 = vtos %v863
        %v865 = vstv %s864
        %v866 = vmul.f32 %v865, %v702
        %v867 = vstv %s857
        %v868 = vsub.f32 %v697, %v867
        %v869 = vmul.f32 %v868, %v866
        %v870 = vadd.f32 %v707, %v869
        %872 = vset.pattern.permute.xlu0 0
        %873 = vperm.xlu0 %872, %v866
        %v874 = vpop.permute.xlu0 %873
        %v876 = vmul.f32 %v682, %v874
        %v877 = vmul.f32 %v684, %v874
        %879 = vset.pattern.permute.xlu0 0
        %880 = vperm.xlu0 %879, %v870
        %v881 = vpop.permute.xlu0 %880
        %v883 = vadd.f32 %v876, %v881
        %v884 = vadd.f32 %v877, %v881
        %v885 = vsel %vm752, %v726, 0.0
        %886 = vadd.xlane.f32.xlu0 %v885
        %v887 = vpop.xlane.xlu0 %886
        %v888 = vrot.slane %v887, 4
        %v889 = vadd.f32 %v887, %v888
        %v890 = vrot.slane %v889, 2
        %v891 = vadd.f32 %v889, %v890
        %v892 = vrot.slane %v891, 1
        %v893 = vadd.f32 %v891, %v892
        %s894 = vtos %v893
        %v895 = vsel %vm752, %v698, 0.0
        %896 = vadd.xlane.f32.xlu0 %v895
        %v897 = vpop.xlane.xlu0 %896
        %v898 = vrot.slane %v897, 4
        %v899 = vadd.f32 %v897, %v898
        %v900 = vrot.slane %v899, 2
        %v901 = vadd.f32 %v899, %v900
        %v902 = vrot.slane %v901, 1
        %v903 = vadd.f32 %v901, %v902
        %s904 = vtos %v903
        %s905 = smul.f32 %s904, 256.0
        %s906 = sadd.f32 %s894, %s905
        %v907 = vmul.f32 %v698, 2.0
        %v908 = vmul.f32 %v907, %v726
        %v909 = vadd.f32 %v746, %v908
        %v910 = vmul.f32 %v698, %v698
        %v911 = vmul.f32 %v910, 256.0
        %v912 = vadd.f32 %v909, %v911
        %v913 = vsel %vm752, %v912, 0.0
        %914 = vadd.xlane.f32.xlu0 %v913
        %v915 = vpop.xlane.xlu0 %914
        %v916 = vrot.slane %v915, 4
        %v917 = vadd.f32 %v915, %v916
        %v918 = vrot.slane %v917, 2
        %v919 = vadd.f32 %v917, %v918
        %v920 = vrot.slane %v919, 1
        %v921 = vadd.f32 %v919, %v920
        %s922 = vtos %v921
        %s923 = smul.f32 %s906, 0.00048828125
        %s924 = smul.f32 %s922, 0.00048828125
        %s925 = smul.f32 %s923, %s923
        %s926 = ssub.f32 %s924, %s925
        %s927 = sadd.f32 %s926, 1e-05
        %v928 = vstv %s927
        %v929 = vrsqrt.pop %v928
        %s930 = vtos %v929
        %v931 = vstv %s930
        %v932 = vmul.f32 %v931, %v703
        %v933 = vstv %s923
        %v934 = vsub.f32 %v698, %v933
        %v935 = vmul.f32 %v934, %v932
        %v936 = vadd.f32 %v708, %v935
        %938 = vset.pattern.permute.xlu0 0
        %939 = vperm.xlu0 %938, %v932
        %v940 = vpop.permute.xlu0 %939
        %v942 = vmul.f32 %v688, %v940
        %v943 = vmul.f32 %v690, %v940
        %945 = vset.pattern.permute.xlu0 0
        %946 = vperm.xlu0 %945, %v936
        %v947 = vpop.permute.xlu0 %946
        %v949 = vadd.f32 %v942, %v947
        %v950 = vadd.f32 %v943, %v947
        %v951 = vsel %vm752, %v729, 0.0
        %952 = vadd.xlane.f32.xlu0 %v951
        %v953 = vpop.xlane.xlu0 %952
        %v954 = vrot.slane %v953, 4
        %v955 = vadd.f32 %v953, %v954
        %v956 = vrot.slane %v955, 2
        %v957 = vadd.f32 %v955, %v956
        %v958 = vrot.slane %v957, 1
        %v959 = vadd.f32 %v957, %v958
        %s960 = vtos %v959
        %v961 = vsel %vm752, %v699, 0.0
        %962 = vadd.xlane.f32.xlu0 %v961
        %v963 = vpop.xlane.xlu0 %962
        %v964 = vrot.slane %v963, 4
        %v965 = vadd.f32 %v963, %v964
        %v966 = vrot.slane %v965, 2
        %v967 = vadd.f32 %v965, %v966
        %v968 = vrot.slane %v967, 1
        %v969 = vadd.f32 %v967, %v968
        %s970 = vtos %v969
        %s971 = smul.f32 %s970, 256.0
        %s972 = sadd.f32 %s960, %s971
        %v973 = vmul.f32 %v699, 2.0
        %v974 = vmul.f32 %v973, %v729
        %v975 = vadd.f32 %v749, %v974
        %v976 = vmul.f32 %v699, %v699
        %v977 = vmul.f32 %v976, 256.0
        %v978 = vadd.f32 %v975, %v977
        %v979 = vsel %vm752, %v978, 0.0
        %980 = vadd.xlane.f32.xlu0 %v979
        %v981 = vpop.xlane.xlu0 %980
        %v982 = vrot.slane %v981, 4
        %v983 = vadd.f32 %v981, %v982
        %v984 = vrot.slane %v983, 2
        %v985 = vadd.f32 %v983, %v984
        %v986 = vrot.slane %v985, 1
        %v987 = vadd.f32 %v985, %v986
        %s988 = vtos %v987
        %s989 = smul.f32 %s972, 0.00048828125
        %s990 = smul.f32 %s988, 0.00048828125
        %s991 = smul.f32 %s989, %s989
        %s992 = ssub.f32 %s990, %s991
        %s993 = sadd.f32 %s992, 1e-05
        %v994 = vstv %s993
        %v995 = vrsqrt.pop %v994
        %s996 = vtos %v995
        %v997 = vstv %s996
        %v998 = vmul.f32 %v997, %v704
        %v999 = vstv %s989
        %v1000 = vsub.f32 %v699, %v999
        %v1001 = vmul.f32 %v1000, %v998
        %v1002 = vadd.f32 %v709, %v1001
        %1004 = vset.pattern.permute.xlu0 0
        %1005 = vperm.xlu0 %1004, %v998
        %v1006 = vpop.permute.xlu0 %1005
        %v1008 = vmul.f32 %v692, %v1006
        %v1009 = vmul.f32 %v694, %v1006
        %1011 = vset.pattern.permute.xlu0 0
        %1012 = vperm.xlu0 %1011, %v1002
        %v1013 = vpop.permute.xlu0 %1012
        %v1015 = vadd.f32 %v1008, %v1013
        %v1016 = vadd.f32 %v1009, %v1013
        %v1017 = vmul.f32 %v710, %v750
        %v1018 = vmul.f32 %v711, %v751
        %v1019 = vadd.f32 %v817, %v1017
        %v1020 = vadd.f32 %v818, %v1018
        %v1021 = vxor.u32 %v1019, 2147483648
        %v1022 = vxor.u32 %v1020, 2147483648
        %v1023 = vmul.f32 %v1021, 1.442695
        %v1024 = vpow.pop %v1023
        %v1025 = vmul.f32 %v1022, 1.442695
        %v1026 = vpow.pop %v1025
        %v1027 = vadd.f32 %v1024, 1.0
        %v1028 = vadd.f32 %v1026, 1.0
        %v1029 = vrcp.pop %v1027
        %v1030 = vmul.f32 1.0, %v1029
        %v1031 = vrcp.pop %v1028
        %v1032 = vmul.f32 1.0, %v1031
        %v1033 = vmul.f32 %v713, %v750
        %v1034 = vmul.f32 %v714, %v751
        %v1035 = vadd.f32 %v883, %v1033
        %v1036 = vadd.f32 %v884, %v1034
        %v1037 = vxor.u32 %v1035, 2147483648
        %v1038 = vxor.u32 %v1036, 2147483648
        %v1039 = vmul.f32 %v1037, 1.442695
        %v1040 = vpow.pop %v1039
        %v1041 = vmul.f32 %v1038, 1.442695
        %v1042 = vpow.pop %v1041
        %v1043 = vadd.f32 %v1040, 1.0
        %v1044 = vadd.f32 %v1042, 1.0
        %v1045 = vrcp.pop %v1043
        %v1046 = vmul.f32 1.0, %v1045
        %v1047 = vrcp.pop %v1044
        %v1048 = vmul.f32 1.0, %v1047
        %v1049 = vmul.f32 %v1046, %v750
        %v1050 = vmul.f32 %v1048, %v751
        %v1051 = vtanh.pop %v949
        %v1052 = vtanh.pop %v950
        %v1053 = vmul.f32 %v1030, %v1051
        %v1054 = vmul.f32 %v1032, %v1052
        %v1055 = vadd.f32 %v1049, %v1053
        %v1056 = vadd.f32 %v1050, %v1054
        %v1057 = vmul.f32 %v716, %v1055
        %v1058 = vmul.f32 %v717, %v1056
        %v1059 = vadd.f32 %v1015, %v1057
        %v1060 = vadd.f32 %v1016, %v1058
        %v1061 = vxor.u32 %v1059, 2147483648
        %v1062 = vxor.u32 %v1060, 2147483648
        %v1063 = vmul.f32 %v1061, 1.442695
        %v1064 = vpow.pop %v1063
        %v1065 = vmul.f32 %v1062, 1.442695
        %v1066 = vpow.pop %v1065
        %v1067 = vadd.f32 %v1064, 1.0
        %v1068 = vadd.f32 %v1066, 1.0
        %v1069 = vrcp.pop %v1067
        %v1070 = vmul.f32 1.0, %v1069
        %v1071 = vrcp.pop %v1068
        %v1072 = vmul.f32 1.0, %v1071
        %v1073 = vtanh.pop %v1055
        %v1074 = vtanh.pop %v1056
        %v1075 = vmul.f32 %v1070, %v1073
        %v1076 = vmul.f32 %v1072, %v1074
        %1077 = vst [vmem:[%s342] sm:$0xff] %v1075
        %1078 = vst [vmem:[%s342 + $0x8] sm:$0xff] %v1076
        %1079 = vst [vmem:[%s349] sm:$0xff] %v1055
        %1080 = vst [vmem:[%s349 + $0x8] sm:$0xff] %v1056
        %s1081 = sand.u32 %s173, 1
        %s1082 = scalar_lea.sflag [#allocation4], %s1081
        %s1083 = sand.u32 %s173, 1
        %s1084 = smul.addr %s1083, 16
        %s1085 = scalar_lea.vmem [#allocation8], %s1084
        %s1086 = sand.u32 %s199, 1
        %s1087 = scalar_lea.sflag [#allocation10], %s1086
        %s1088 = sand.u32 %s199, 1
        %s1089 = smul.addr %s1088, 16
        %s1090 = scalar_lea.vmem [#allocation9], %s1089
        // Predicated region
        $region57: #{tpu_custom_call.1} parent=43 // pred_check
          %p1091 = pneg %p183
        $region58: #{tpu_custom_call.1} parent=43 // pred_check_branch
          %1093 = sbr.rel (%p1091) target = $region60
        $region59: #{tpu_custom_call.1} parent=43 // pred_region
          %s1095 = ssub.s32 256, 256
          %1096 = vsyncadd %s1082, %s1095
          %s1097 = smul.addr %s29, 2
          %s1098 = smul.addr %s1097, 128
          %s1099 = scalar_lea.hbm %s6, %s1098
          %s1101 = sshll.u32 %s1085, 4
          %s1102 = int_to_ptr.vmem [resolvable:$true] %s1101
          %1104 = dma.vmem_to_hbm [thread:$0]  %s1102, 256, %s1099, %s1082
        $region60: #{tpu_custom_call.1} parent=43 // pred_fallthru
          _
        // Predicated region
        $region61: #{tpu_custom_call.1} parent=43 // pred_check
          %p1105 = pneg %p209
        $region62: #{tpu_custom_call.1} parent=43 // pred_check_branch
          %1107 = sbr.rel (%p1105) target = $region64
        $region63: #{tpu_custom_call.1} parent=43 // pred_region
          %s1109 = ssub.s32 256, 256
          %1110 = vsyncadd %s1087, %s1109
          %s1111 = smul.addr %s29, 2
          %s1112 = smul.addr %s1111, 128
          %s1113 = scalar_lea.hbm %s7, %s1112
          %s1115 = sshll.u32 %s1090, 4
          %s1116 = int_to_ptr.vmem [resolvable:$true] %s1115
          %1118 = dma.vmem_to_hbm [thread:$0]  %s1116, 256, %s1113, %s1087
        $region64: #{tpu_custom_call.1} parent=43 // pred_fallthru
          _
      $region44: #{tpu_custom_call.1} parent=5 // pred_fallthru
        _
      %p1119 = scmp.le.s32.totalorder 2, %s24
      // Predicated region
      $region65: #{tpu_custom_call.1} parent=5 // pred_check
        %p1120 = pneg %p1119
      $region66: #{tpu_custom_call.1} parent=5 // pred_check_branch
        %1122 = sbr.rel (%p1120) target = $region68
      $region67: #{tpu_custom_call.1} parent=5 // pred_region
        %s1123 = ssub.s32 %s24, 2
        // Predicated region
        $region69: #{tpu_custom_call.1} parent=67 // pred_check
          %p1124 = pneg %p189
        $region70: #{tpu_custom_call.1} parent=67 // pred_check_branch
          %1126 = sbr.rel (%p1124) target = $region72
        $region71: #{tpu_custom_call.1} parent=67 // pred_region
          %s1127 = sand.u32 %s174, 1
          %s1128 = scalar_lea.sflag [#allocation4], %s1127
          %s1129 = sand.u32 %s174, 1
          %s1130 = smul.addr %s1129, 16
          %s1131 = scalar_lea.vmem [#allocation8], %s1130
          %1132 = dma.done %s1128, 256
        $region72: #{tpu_custom_call.1} parent=67 // pred_fallthru
          _
        // Predicated region
        $region73: #{tpu_custom_call.1} parent=67 // pred_check
          %p1133 = pneg %p215
        $region74: #{tpu_custom_call.1} parent=67 // pred_check_branch
          %1135 = sbr.rel (%p1133) target = $region76
        $region75: #{tpu_custom_call.1} parent=67 // pred_region
          %s1136 = sand.u32 %s200, 1
          %s1137 = scalar_lea.sflag [#allocation10], %s1136
          %s1138 = sand.u32 %s200, 1
          %s1139 = smul.addr %s1138, 16
          %s1140 = scalar_lea.vmem [#allocation9], %s1139
          %1141 = dma.done %s1137, 256
        $region76: #{tpu_custom_call.1} parent=67 // pred_fallthru
          _
      $region68: #{tpu_custom_call.1} parent=5 // pred_fallthru
        _
    $region6: #{tpu_custom_call.1} parent=1 // loop_footer
      %s28 = sadd.s32 1, %s24
    $region7: #{tpu_custom_call.1} parent=1 // loop_footer_branch
      %23 = sbr.rel target = $region3
    $region8: #{tpu_custom_call.1} parent=1 // loop_exit
      _
    %1142 = vsyncpa [#allocation3], 1
    %s1143 = scalar_lea.sflag [#allocation3], 1
    %1144 = vsyncpa %s1143, 1
    %1145 = vsyncpa [#allocation6], 1
    %1146 = vsyncpa [#allocation4], 1
    %s1147 = scalar_lea.sflag [#allocation4], 1
    %1148 = vsyncpa %s1147, 1
    %1149 = vsyncpa [#allocation10], 1
    %s1150 = scalar_lea.sflag [#allocation10], 1
    %1151 = vsyncpa %s1150, 1

</llo_original>
